<compile_context>
chip_gen: v6e
topology: v6e:2x2x1
jax: 0.10.0
libtpu: 0.0.40
codegen_flags: <defaults>
</compile_context>

<pallas_src>
import functools

import jax
import jax.numpy as jnp
from jax.experimental import pallas as pl
from jax.experimental.pallas import tpu as pltpu


DIMS = [28 * 28, 64, 32, 16, 8, 16, 32, 64, 28 * 28]
N_LAYERS = len(DIMS) - 1
IN_DIM = DIMS[0]
OUT_DIM = DIMS[-1]
DEFAULT_TILE_B = 256  # >=256 fills v6e/v7x MXU rows; multiple of 128 suffices on v5e.


# ----------------------------------------------------------------------------
# Pallas kernel: full autoencoder forward for one (TILE_B, 784) batch tile
# ----------------------------------------------------------------------------
def autoencoder_kernel(x_ref,
                       w1, b1, w2, b2, w3, b3, w4, b4,   # encoder
                       w5, b5, w6, b6, w7, b7, w8, b8,   # decoder
                       out_ref):
    def dense(h, w_ref, b_ref):
        # bf16 x bf16 operands on the MXU with f32 accumulation; bias add in f32 on the VPU.
        return jnp.dot(h.astype(jnp.bfloat16), w_ref[...],
                       preferred_element_type=jnp.float32) + b_ref[...]

    h = x_ref[...]                               # (TILE_B, 784) bf16

    # encoder: 784 -> 64 -> 32 -> 16 -> 8
    h = jnp.maximum(dense(h, w1, b1), 0.0)
    h = jnp.maximum(dense(h, w2, b2), 0.0)
    h = jnp.maximum(dense(h, w3, b3), 0.0)
    h = dense(h, w4, b4)                         # bottleneck (no activation)

    # decoder: 8 -> 16 -> 32 -> 64 -> 784, final Sigmoid
    h = jnp.maximum(dense(h, w5, b5), 0.0)
    h = jnp.maximum(dense(h, w6, b6), 0.0)
    h = jnp.maximum(dense(h, w7, b7), 0.0)
    h = dense(h, w8, b8)
    out_ref[...] = jax.nn.sigmoid(h).astype(out_ref.dtype)


# ----------------------------------------------------------------------------
# Wrapper
# ----------------------------------------------------------------------------
def _round_up(n, m):
    return ((n + m - 1) // m) * m


@functools.partial(jax.jit, static_argnames=("tile_b",))
def autoencoder_forward(x, params, *, tile_b=DEFAULT_TILE_B):
    """x: (B, 784) float32.  params: flat list [w1, b1, ..., w8, b8] (w as (in, out))."""
    batch = x.shape[0]
    # Effective batch tile: never larger than the (sublane-rounded) batch, always a mult of 8.
    tb = min(tile_b, max(8, _round_up(batch, 8)))
    grid = (pl.cdiv(batch, tb),)

    # bf16 for the big streamed/matmul operands; biases stay f32.
    x_bf16 = x.astype(jnp.bfloat16)
    kernel_params = []
    for i in range(N_LAYERS):
        w, b = params[2 * i], params[2 * i + 1]
        kernel_params.append(w.astype(jnp.bfloat16))
        kernel_params.append(b.astype(jnp.float32))

    # Batch-tiled x / out; weights & biases as full resident blocks (constant index_map).
    x_spec = pl.BlockSpec((tb, IN_DIM), lambda i: (i, 0))
    out_spec = pl.BlockSpec((tb, OUT_DIM), lambda i: (i, 0))
    param_specs = [pl.BlockSpec(p.shape, lambda i: (0, 0)) for p in kernel_params]

    return pl.pallas_call(
        autoencoder_kernel,
        out_shape=jax.ShapeDtypeStruct((batch, OUT_DIM), jnp.float32),
        grid=grid,
        in_specs=[x_spec] + param_specs,
        out_specs=out_spec,
        compiler_params=pltpu.CompilerParams(
            dimension_semantics=("parallel",),       # shards batch tiles across v7x's 2 TCs
            vmem_limit_bytes=32 * 1024 * 1024,       # safe on v5e/v6e/v7x; tiles use only ~3 MB
        ),
    )(x_bf16, *kernel_params)


# ----------------------------------------------------------------------------
# Deterministic parameter init (PyTorch-style uniform(-1/sqrt(fan_in), +...))
# ----------------------------------------------------------------------------
def init_params(key):
    params = []
    for i in range(N_LAYERS):
        fan_in, fan_out = DIMS[i], DIMS[i + 1]
        key, kw, kb = jax.random.split(key, 3)
        bound = 1.0 / float(fan_in) ** 0.5
        # stored as (in, out) == transpose of PyTorch's (out, in)
        w = jax.random.uniform(kw, (fan_in, fan_out), jnp.float32, -bound, bound)
        b = jax.random.uniform(kb, (1, fan_out), jnp.float32, -bound, bound)
        params.extend([w, b])
    return params


# Pure-JAX reference mirroring the kernel numerics (bf16-rounded operands, f32 accumulate)
def reference_forward(x, params):
    acts = ["relu", "relu", "relu", None, "relu", "relu", "relu", "sigmoid"]
    h = x.astype(jnp.float32)
    for i, act in enumerate(acts):
        w = params[2 * i].astype(jnp.bfloat16).astype(jnp.float32)
        b = params[2 * i + 1]
        hb = h.astype(jnp.bfloat16).astype(jnp.float32)
        h = hb @ w + b
        if act == "relu":
            h = jnp.maximum(h, 0.0)
        elif act == "sigmoid":
            h = jax.nn.sigmoid(h)
    return h


if __name__ == "__main__":
    key = jax.random.PRNGKey(0)
    key, kx = jax.random.split(key)
    params = init_params(key)

    # Small MNIST-like batch (single tile path).
    batch = 8
    x = jax.random.uniform(kx, (batch, IN_DIM), jnp.float32)
    out = jax.block_until_ready(autoencoder_forward(x, params))
    ref = reference_forward(x, params)
    assert out.shape == (batch, OUT_DIM), out.shape
    assert jnp.allclose(out, ref, atol=5e-3, rtol=1e-2), "mismatch vs reference (batch=8)"

    # Multi-tile batch with a partial last block (520 = 2*256 + 8) to exercise the batch grid.
    key, kx2 = jax.random.split(key)
    batch2 = 520
    x2 = jax.random.uniform(kx2, (batch2, IN_DIM), jnp.float32)
    out2 = jax.block_until_ready(autoencoder_forward(x2, params))
    ref2 = reference_forward(x2, params)
    assert out2.shape == (batch2, OUT_DIM), out2.shape
    assert jnp.allclose(out2, ref2, atol=5e-3, rtol=1e-2), "mismatch vs reference (batch=520)"

    print("KERNEL_OK")
</pallas_src>

<mosaic_0001>
module attributes {stable_mosaic.version = 11 : i64} {
  func.func @autoencoder_kernel(%arg0: i32, %arg1: memref<8x784xbf16, #tpu.memory_space<vmem>>, %arg2: memref<784x64xbf16, #tpu.memory_space<vmem>>, %arg3: memref<1x64xf32, #tpu.memory_space<vmem>>, %arg4: memref<64x32xbf16, #tpu.memory_space<vmem>>, %arg5: memref<1x32xf32, #tpu.memory_space<vmem>>, %arg6: memref<32x16xbf16, #tpu.memory_space<vmem>>, %arg7: memref<1x16xf32, #tpu.memory_space<vmem>>, %arg8: memref<16x8xbf16, #tpu.memory_space<vmem>>, %arg9: memref<1x8xf32, #tpu.memory_space<vmem>>, %arg10: memref<8x16xbf16, #tpu.memory_space<vmem>>, %arg11: memref<1x16xf32, #tpu.memory_space<vmem>>, %arg12: memref<16x32xbf16, #tpu.memory_space<vmem>>, %arg13: memref<1x32xf32, #tpu.memory_space<vmem>>, %arg14: memref<32x64xbf16, #tpu.memory_space<vmem>>, %arg15: memref<1x64xf32, #tpu.memory_space<vmem>>, %arg16: memref<64x784xbf16, #tpu.memory_space<vmem>>, %arg17: memref<1x784xf32, #tpu.memory_space<vmem>>, %arg18: memref<8x784xf32, #tpu.memory_space<vmem>>) attributes {dimension_semantics = [#tpu.dimension_semantics<parallel>], iteration_bounds = array<i64: 1>, scalar_prefetch = 0 : i64, scratch_operands = 0 : i64, tpu.core_type = #tpu.core_type<tc>, window_params = [{transform_indices = @transform_0, window_bounds = array<i64: 8, 784>}, {pipeline_mode = #tpu.pipeline_mode<synchronous>, transform_indices = @transform_1, window_bounds = array<i64: 784, 64>}, {pipeline_mode = #tpu.pipeline_mode<synchronous>, transform_indices = @transform_2, window_bounds = array<i64: 1, 64>}, {pipeline_mode = #tpu.pipeline_mode<synchronous>, transform_indices = @transform_3, window_bounds = array<i64: 64, 32>}, {pipeline_mode = #tpu.pipeline_mode<synchronous>, transform_indices = @transform_4, window_bounds = array<i64: 1, 32>}, {pipeline_mode = #tpu.pipeline_mode<synchronous>, transform_indices = @transform_5, window_bounds = array<i64: 32, 16>}, {pipeline_mode = #tpu.pipeline_mode<synchronous>, transform_indices = @transform_6, window_bounds = array<i64: 1, 16>}, {pipeline_mode = #tpu.pipeline_mode<synchronous>, transform_indices = @transform_7, window_bounds = array<i64: 16, 8>}, {pipeline_mode = #tpu.pipeline_mode<synchronous>, transform_indices = @transform_8, window_bounds = array<i64: 1, 8>}, {pipeline_mode = #tpu.pipeline_mode<synchronous>, transform_indices = @transform_9, window_bounds = array<i64: 8, 16>}, {pipeline_mode = #tpu.pipeline_mode<synchronous>, transform_indices = @transform_10, window_bounds = array<i64: 1, 16>}, {pipeline_mode = #tpu.pipeline_mode<synchronous>, transform_indices = @transform_11, window_bounds = array<i64: 16, 32>}, {pipeline_mode = #tpu.pipeline_mode<synchronous>, transform_indices = @transform_12, window_bounds = array<i64: 1, 32>}, {pipeline_mode = #tpu.pipeline_mode<synchronous>, transform_indices = @transform_13, window_bounds = array<i64: 32, 64>}, {pipeline_mode = #tpu.pipeline_mode<synchronous>, transform_indices = @transform_14, window_bounds = array<i64: 1, 64>}, {pipeline_mode = #tpu.pipeline_mode<synchronous>, transform_indices = @transform_15, window_bounds = array<i64: 64, 784>}, {pipeline_mode = #tpu.pipeline_mode<synchronous>, transform_indices = @transform_16, window_bounds = array<i64: 1, 784>}, {transform_indices = @transform_17, window_bounds = array<i64: 8, 784>}]} {
    %c0 = arith.constant 0 : index
    %c0_0 = arith.constant 0 : index
    %0 = vector.load %arg1[%c0, %c0_0] : memref<8x784xbf16, #tpu.memory_space<vmem>>, vector<8x784xbf16>
    %c0_1 = arith.constant 0 : index
    %c0_2 = arith.constant 0 : index
    %1 = vector.load %arg2[%c0_1, %c0_2] : memref<784x64xbf16, #tpu.memory_space<vmem>>, vector<784x64xbf16>
    %cst = arith.constant dense<0.000000e+00> : vector<8x64xf32>
    %2 = tpu.matmul %0, %1, %cst {dimension_numbers = #tpu.dot_dimension_numbers<[1], [0], [0], [1], [0, 0, 1, 1], [], []>} : vector<8x784xbf16>, vector<784x64xbf16>, vector<8x64xf32> -> vector<8x64xf32>
    %c0_3 = arith.constant 0 : index
    %c0_4 = arith.constant 0 : index
    %3 = vector.load %arg3[%c0_3, %c0_4] : memref<1x64xf32, #tpu.memory_space<vmem>>, vector<1x64xf32>
    %4 = vector.broadcast %3 : vector<1x64xf32> to vector<8x64xf32>
    %5 = arith.addf %2, %4 : vector<8x64xf32>
    %cst_5 = arith.constant 0.000000e+00 : f32
    %6 = vector.broadcast %cst_5 : f32 to vector<8x64xf32>
    %7 = arith.maximumf %5, %6 : vector<8x64xf32>
    %8 = arith.truncf %7 : vector<8x64xf32> to vector<8x64xbf16>
    %c0_6 = arith.constant 0 : index
    %c0_7 = arith.constant 0 : index
    %9 = vector.load %arg4[%c0_6, %c0_7] : memref<64x32xbf16, #tpu.memory_space<vmem>>, vector<64x32xbf16>
    %cst_8 = arith.constant dense<0.000000e+00> : vector<8x32xf32>
    %10 = tpu.matmul %8, %9, %cst_8 {dimension_numbers = #tpu.dot_dimension_numbers<[1], [0], [0], [1], [0, 0, 1, 1], [], []>} : vector<8x64xbf16>, vector<64x32xbf16>, vector<8x32xf32> -> vector<8x32xf32>
    %c0_9 = arith.constant 0 : index
    %c0_10 = arith.constant 0 : index
    %11 = vector.load %arg5[%c0_9, %c0_10] : memref<1x32xf32, #tpu.memory_space<vmem>>, vector<1x32xf32>
    %12 = vector.broadcast %11 : vector<1x32xf32> to vector<8x32xf32>
    %13 = arith.addf %10, %12 : vector<8x32xf32>
    %cst_11 = arith.constant 0.000000e+00 : f32
    %14 = vector.broadcast %cst_11 : f32 to vector<8x32xf32>
    %15 = arith.maximumf %13, %14 : vector<8x32xf32>
    %16 = arith.truncf %15 : vector<8x32xf32> to vector<8x32xbf16>
    %c0_12 = arith.constant 0 : index
    %c0_13 = arith.constant 0 : index
    %17 = vector.load %arg6[%c0_12, %c0_13] : memref<32x16xbf16, #tpu.memory_space<vmem>>, vector<32x16xbf16>
    %cst_14 = arith.constant dense<0.000000e+00> : vector<8x16xf32>
    %18 = tpu.matmul %16, %17, %cst_14 {dimension_numbers = #tpu.dot_dimension_numbers<[1], [0], [0], [1], [0, 0, 1, 1], [], []>} : vector<8x32xbf16>, vector<32x16xbf16>, vector<8x16xf32> -> vector<8x16xf32>
    %c0_15 = arith.constant 0 : index
    %c0_16 = arith.constant 0 : index
    %19 = vector.load %arg7[%c0_15, %c0_16] : memref<1x16xf32, #tpu.memory_space<vmem>>, vector<1x16xf32>
    %20 = vector.broadcast %19 : vector<1x16xf32> to vector<8x16xf32>
    %21 = arith.addf %18, %20 : vector<8x16xf32>
    %cst_17 = arith.constant 0.000000e+00 : f32
    %22 = vector.broadcast %cst_17 : f32 to vector<8x16xf32>
    %23 = arith.maximumf %21, %22 : vector<8x16xf32>
    %24 = arith.truncf %23 : vector<8x16xf32> to vector<8x16xbf16>
    %c0_18 = arith.constant 0 : index
    %c0_19 = arith.constant 0 : index
    %25 = vector.load %arg8[%c0_18, %c0_19] : memref<16x8xbf16, #tpu.memory_space<vmem>>, vector<16x8xbf16>
    %cst_20 = arith.constant dense<0.000000e+00> : vector<8x8xf32>
    %26 = tpu.matmul %24, %25, %cst_20 {dimension_numbers = #tpu.dot_dimension_numbers<[1], [0], [0], [1], [0, 0, 1, 1], [], []>} : vector<8x16xbf16>, vector<16x8xbf16>, vector<8x8xf32> -> vector<8x8xf32>
    %c0_21 = arith.constant 0 : index
    %c0_22 = arith.constant 0 : index
    %27 = vector.load %arg9[%c0_21, %c0_22] : memref<1x8xf32, #tpu.memory_space<vmem>>, vector<1x8xf32>
    %28 = vector.broadcast %27 : vector<1x8xf32> to vector<8x8xf32>
    %29 = arith.addf %26, %28 : vector<8x8xf32>
    %30 = arith.truncf %29 : vector<8x8xf32> to vector<8x8xbf16>
    %c0_23 = arith.constant 0 : index
    %c0_24 = arith.constant 0 : index
    %31 = vector.load %arg10[%c0_23, %c0_24] : memref<8x16xbf16, #tpu.memory_space<vmem>>, vector<8x16xbf16>
    %cst_25 = arith.constant dense<0.000000e+00> : vector<8x16xf32>
    %32 = tpu.matmul %30, %31, %cst_25 {dimension_numbers = #tpu.dot_dimension_numbers<[1], [0], [0], [1], [0, 0, 1, 1], [], []>} : vector<8x8xbf16>, vector<8x16xbf16>, vector<8x16xf32> -> vector<8x16xf32>
    %c0_26 = arith.constant 0 : index
    %c0_27 = arith.constant 0 : index
    %33 = vector.load %arg11[%c0_26, %c0_27] : memref<1x16xf32, #tpu.memory_space<vmem>>, vector<1x16xf32>
    %34 = vector.broadcast %33 : vector<1x16xf32> to vector<8x16xf32>
    %35 = arith.addf %32, %34 : vector<8x16xf32>
    %cst_28 = arith.constant 0.000000e+00 : f32
    %36 = vector.broadcast %cst_28 : f32 to vector<8x16xf32>
    %37 = arith.maximumf %35, %36 : vector<8x16xf32>
    %38 = arith.truncf %37 : vector<8x16xf32> to vector<8x16xbf16>
    %c0_29 = arith.constant 0 : index
    %c0_30 = arith.constant 0 : index
    %39 = vector.load %arg12[%c0_29, %c0_30] : memref<16x32xbf16, #tpu.memory_space<vmem>>, vector<16x32xbf16>
    %cst_31 = arith.constant dense<0.000000e+00> : vector<8x32xf32>
    %40 = tpu.matmul %38, %39, %cst_31 {dimension_numbers = #tpu.dot_dimension_numbers<[1], [0], [0], [1], [0, 0, 1, 1], [], []>} : vector<8x16xbf16>, vector<16x32xbf16>, vector<8x32xf32> -> vector<8x32xf32>
    %c0_32 = arith.constant 0 : index
    %c0_33 = arith.constant 0 : index
    %41 = vector.load %arg13[%c0_32, %c0_33] : memref<1x32xf32, #tpu.memory_space<vmem>>, vector<1x32xf32>
    %42 = vector.broadcast %41 : vector<1x32xf32> to vector<8x32xf32>
    %43 = arith.addf %40, %42 : vector<8x32xf32>
    %cst_34 = arith.constant 0.000000e+00 : f32
    %44 = vector.broadcast %cst_34 : f32 to vector<8x32xf32>
    %45 = arith.maximumf %43, %44 : vector<8x32xf32>
    %46 = arith.truncf %45 : vector<8x32xf32> to vector<8x32xbf16>
    %c0_35 = arith.constant 0 : index
    %c0_36 = arith.constant 0 : index
    %47 = vector.load %arg14[%c0_35, %c0_36] : memref<32x64xbf16, #tpu.memory_space<vmem>>, vector<32x64xbf16>
    %cst_37 = arith.constant dense<0.000000e+00> : vector<8x64xf32>
    %48 = tpu.matmul %46, %47, %cst_37 {dimension_numbers = #tpu.dot_dimension_numbers<[1], [0], [0], [1], [0, 0, 1, 1], [], []>} : vector<8x32xbf16>, vector<32x64xbf16>, vector<8x64xf32> -> vector<8x64xf32>
    %c0_38 = arith.constant 0 : index
    %c0_39 = arith.constant 0 : index
    %49 = vector.load %arg15[%c0_38, %c0_39] : memref<1x64xf32, #tpu.memory_space<vmem>>, vector<1x64xf32>
    %50 = vector.broadcast %49 : vector<1x64xf32> to vector<8x64xf32>
    %51 = arith.addf %48, %50 : vector<8x64xf32>
    %cst_40 = arith.constant 0.000000e+00 : f32
    %52 = vector.broadcast %cst_40 : f32 to vector<8x64xf32>
    %53 = arith.maximumf %51, %52 : vector<8x64xf32>
    %54 = arith.truncf %53 : vector<8x64xf32> to vector<8x64xbf16>
    %c0_41 = arith.constant 0 : index
    %c0_42 = arith.constant 0 : index
    %55 = vector.load %arg16[%c0_41, %c0_42] : memref<64x784xbf16, #tpu.memory_space<vmem>>, vector<64x784xbf16>
    %cst_43 = arith.constant dense<0.000000e+00> : vector<8x784xf32>
    %56 = tpu.matmul %54, %55, %cst_43 {dimension_numbers = #tpu.dot_dimension_numbers<[1], [0], [0], [1], [0, 0, 1, 1], [], []>} : vector<8x64xbf16>, vector<64x784xbf16>, vector<8x784xf32> -> vector<8x784xf32>
    %c0_44 = arith.constant 0 : index
    %c0_45 = arith.constant 0 : index
    %57 = vector.load %arg17[%c0_44, %c0_45] : memref<1x784xf32, #tpu.memory_space<vmem>>, vector<1x784xf32>
    %58 = vector.broadcast %57 : vector<1x784xf32> to vector<8x784xf32>
    %59 = arith.addf %56, %58 : vector<8x784xf32>
    %60 = arith.negf %59 : vector<8x784xf32>
    %61 = math.exp %60 : vector<8x784xf32>
    %cst_46 = arith.constant 1.000000e+00 : f32
    %62 = vector.broadcast %cst_46 : f32 to vector<8x784xf32>
    %63 = arith.addf %62, %61 : vector<8x784xf32>
    %64 = arith.divf %62, %63 : vector<8x784xf32>
    %c0_47 = arith.constant 0 : index
    %c0_48 = arith.constant 0 : index
    %65 = vector.load %arg18[%c0_47, %c0_48] : memref<8x784xf32, #tpu.memory_space<vmem>>, vector<8x784xf32>
    tpu.vector_store %arg18[%c0_47, %c0_48], %64 {strides = array<i32>} : memref<8x784xf32, #tpu.memory_space<vmem>>, vector<8x784xf32>,
    return
  }
  func.func @transform_0(%arg0: i32) -> (i32, i32) {
    %c0_i32 = arith.constant 0 : i32
    %c0_i32_0 = arith.constant 0 : i32
    return %arg0, %c0_i32 : i32, i32
  }
  func.func @transform_1(%arg0: i32) -> (i32, i32) {
    %c0_i32 = arith.constant 0 : i32
    %c0_i32_0 = arith.constant 0 : i32
    %c0_i32_1 = arith.constant 0 : i32
    return %c0_i32, %c0_i32_0 : i32, i32
  }
  func.func @transform_2(%arg0: i32) -> (i32, i32) {
    %c0_i32 = arith.constant 0 : i32
    %c0_i32_0 = arith.constant 0 : i32
    %c0_i32_1 = arith.constant 0 : i32
    return %c0_i32, %c0_i32_0 : i32, i32
  }
  func.func @transform_3(%arg0: i32) -> (i32, i32) {
    %c0_i32 = arith.constant 0 : i32
    %c0_i32_0 = arith.constant 0 : i32
    %c0_i32_1 = arith.constant 0 : i32
    return %c0_i32, %c0_i32_0 : i32, i32
  }
  func.func @transform_4(%arg0: i32) -> (i32, i32) {
    %c0_i32 = arith.constant 0 : i32
    %c0_i32_0 = arith.constant 0 : i32
    %c0_i32_1 = arith.constant 0 : i32
    return %c0_i32, %c0_i32_0 : i32, i32
  }
  func.func @transform_5(%arg0: i32) -> (i32, i32) {
    %c0_i32 = arith.constant 0 : i32
    %c0_i32_0 = arith.constant 0 : i32
    %c0_i32_1 = arith.constant 0 : i32
    return %c0_i32, %c0_i32_0 : i32, i32
  }
  func.func @transform_6(%arg0: i32) -> (i32, i32) {
    %c0_i32 = arith.constant 0 : i32
    %c0_i32_0 = arith.constant 0 : i32
    %c0_i32_1 = arith.constant 0 : i32
    return %c0_i32, %c0_i32_0 : i32, i32
  }
  func.func @transform_7(%arg0: i32) -> (i32, i32) {
    %c0_i32 = arith.constant 0 : i32
    %c0_i32_0 = arith.constant 0 : i32
    %c0_i32_1 = arith.constant 0 : i32
    return %c0_i32, %c0_i32_0 : i32, i32
  }
  func.func @transform_8(%arg0: i32) -> (i32, i32) {
    %c0_i32 = arith.constant 0 : i32
    %c0_i32_0 = arith.constant 0 : i32
    %c0_i32_1 = arith.constant 0 : i32
    return %c0_i32, %c0_i32_0 : i32, i32
  }
  func.func @transform_9(%arg0: i32) -> (i32, i32) {
    %c0_i32 = arith.constant 0 : i32
    %c0_i32_0 = arith.constant 0 : i32
    %c0_i32_1 = arith.constant 0 : i32
    return %c0_i32, %c0_i32_0 : i32, i32
  }
  func.func @transform_10(%arg0: i32) -> (i32, i32) {
    %c0_i32 = arith.constant 0 : i32
    %c0_i32_0 = arith.constant 0 : i32
    %c0_i32_1 = arith.constant 0 : i32
    return %c0_i32, %c0_i32_0 : i32, i32
  }
  func.func @transform_11(%arg0: i32) -> (i32, i32) {
    %c0_i32 = arith.constant 0 : i32
    %c0_i32_0 = arith.constant 0 : i32
    %c0_i32_1 = arith.constant 0 : i32
    return %c0_i32, %c0_i32_0 : i32, i32
  }
  func.func @transform_12(%arg0: i32) -> (i32, i32) {
    %c0_i32 = arith.constant 0 : i32
    %c0_i32_0 = arith.constant 0 : i32
    %c0_i32_1 = arith.constant 0 : i32
    return %c0_i32, %c0_i32_0 : i32, i32
  }
  func.func @transform_13(%arg0: i32) -> (i32, i32) {
    %c0_i32 = arith.constant 0 : i32
    %c0_i32_0 = arith.constant 0 : i32
    %c0_i32_1 = arith.constant 0 : i32
    return %c0_i32, %c0_i32_0 : i32, i32
  }
  func.func @transform_14(%arg0: i32) -> (i32, i32) {
    %c0_i32 = arith.constant 0 : i32
    %c0_i32_0 = arith.constant 0 : i32
    %c0_i32_1 = arith.constant 0 : i32
    return %c0_i32, %c0_i32_0 : i32, i32
  }
  func.func @transform_15(%arg0: i32) -> (i32, i32) {
    %c0_i32 = arith.constant 0 : i32
    %c0_i32_0 = arith.constant 0 : i32
    %c0_i32_1 = arith.constant 0 : i32
    return %c0_i32, %c0_i32_0 : i32, i32
  }
  func.func @transform_16(%arg0: i32) -> (i32, i32) {
    %c0_i32 = arith.constant 0 : i32
    %c0_i32_0 = arith.constant 0 : i32
    %c0_i32_1 = arith.constant 0 : i32
    return %c0_i32, %c0_i32_0 : i32, i32
  }
  func.func @transform_17(%arg0: i32) -> (i32, i32) {
    %c0_i32 = arith.constant 0 : i32
    %c0_i32_0 = arith.constant 0 : i32
    return %arg0, %c0_i32 : i32, i32
  }
}

</mosaic_0001>

<llo_original>
// kernel: autoencoder_forward.1
$region0: #{autoencoder_forward.1}
  #allocation0 [shape = 'u32[]', space=smem, size = 0x4, offset = 0x4, fixed_abs, tag = 'smem constant byte address 0x4 - core index']
  #allocation1 [shape = 'u32[144,128]{1,0:T(1,128)}', space=vmem, size = 0x12000, scoped, tag = 'internal scratch']
  %s0 = inlined_call_operand.vmem [shape: bf16[8,784], index: 0, kind: input, shape index: {}]
  %s1 = inlined_call_operand.vmem [shape: bf16[784,64], index: 1, kind: input, shape index: {}]
  %s2 = inlined_call_operand.vmem [shape: f32[1,64], index: 2, kind: input, shape index: {}]
  %s3 = inlined_call_operand.vmem [shape: bf16[64,32], index: 3, kind: input, shape index: {}]
  %s4 = inlined_call_operand.vmem [shape: f32[1,32], index: 4, kind: input, shape index: {}]
  %s5 = inlined_call_operand.vmem [shape: bf16[32,16], index: 5, kind: input, shape index: {}]
  %s6 = inlined_call_operand.vmem [shape: f32[1,16], index: 6, kind: input, shape index: {}]
  %s7 = inlined_call_operand.vmem [shape: bf16[16,8], index: 7, kind: input, shape index: {}]
  %s8 = inlined_call_operand.vmem [shape: f32[1,8], index: 8, kind: input, shape index: {}]
  %s9 = inlined_call_operand.vmem [shape: bf16[8,16], index: 9, kind: input, shape index: {}]
  %s10 = inlined_call_operand.vmem [shape: f32[1,16], index: 10, kind: input, shape index: {}]
  %s11 = inlined_call_operand.vmem [shape: bf16[16,32], index: 11, kind: input, shape index: {}]
  %s12 = inlined_call_operand.vmem [shape: f32[1,32], index: 12, kind: input, shape index: {}]
  %s13 = inlined_call_operand.vmem [shape: bf16[32,64], index: 13, kind: input, shape index: {}]
  %s14 = inlined_call_operand.vmem [shape: f32[1,64], index: 14, kind: input, shape index: {}]
  %s15 = inlined_call_operand.vmem [shape: bf16[64,784], index: 15, kind: input, shape index: {}]
  %s16 = inlined_call_operand.vmem [shape: f32[1,784], index: 16, kind: input, shape index: {}]
  %s17 = inlined_call_operand.hbm [shape: f32[8,784], index: 17, kind: output, shape index: {}]
  %s18 = sld [smem:[#allocation0]]
  $region78: #{autoencoder_forward.1} parent=0
    _
  %s20 = ssub.s32 1, %s18
  %s21 = scalar_select 0, %s20, %s18
  $region1: #{autoencoder_forward.1} parent=0
    #allocation2 [shape = 'u8[28672]{0}', space=vmem, size = 0x7000, scoped, tag = 'output window, operand 0, single buffered']
    #allocation3 [shape = 's32[1]{0}', space=sflag, size = 0x4, scoped, tag = 'scoped memory for autoencoder_forward.1']
    %22 = vsyncpa [#allocation3], 0
    // Predicated region
    $region2: #{autoencoder_forward.1} parent=1 // pred_check
      _
    $region3: #{autoencoder_forward.1} parent=1 // pred_check_branch
      %24 = sbr.rel (0) target = $region5
    $region4: #{autoencoder_forward.1} parent=1 // pred_region
      _
    $region5: #{autoencoder_forward.1} parent=1 // pred_fallthru
      _
    // Predicated region
    $region6: #{autoencoder_forward.1} parent=1 // pred_check
      _
    $region7: #{autoencoder_forward.1} parent=1 // pred_check_branch
      %26 = sbr.rel (0) target = $region9
    $region8: #{autoencoder_forward.1} parent=1 // pred_region
      _
    $region9: #{autoencoder_forward.1} parent=1 // pred_fallthru
      _
    // Predicated region
    $region10: #{autoencoder_forward.1} parent=1 // pred_check
      _
    $region11: #{autoencoder_forward.1} parent=1 // pred_check_branch
      %28 = sbr.rel (0) target = $region13
    $region12: #{autoencoder_forward.1} parent=1 // pred_region
      _
    $region13: #{autoencoder_forward.1} parent=1 // pred_fallthru
      _
    // Predicated region
    $region14: #{autoencoder_forward.1} parent=1 // pred_check
      _
    $region15: #{autoencoder_forward.1} parent=1 // pred_check_branch
      %30 = sbr.rel (0) target = $region17
    $region16: #{autoencoder_forward.1} parent=1 // pred_region
      _
    $region17: #{autoencoder_forward.1} parent=1 // pred_fallthru
      _
    // Predicated region
    $region18: #{autoencoder_forward.1} parent=1 // pred_check
      _
    $region19: #{autoencoder_forward.1} parent=1 // pred_check_branch
      %32 = sbr.rel (0) target = $region21
    $region20: #{autoencoder_forward.1} parent=1 // pred_region
      _
    $region21: #{autoencoder_forward.1} parent=1 // pred_fallthru
      _
    // Predicated region
    $region22: #{autoencoder_forward.1} parent=1 // pred_check
      _
    $region23: #{autoencoder_forward.1} parent=1 // pred_check_branch
      %34 = sbr.rel (0) target = $region25
    $region24: #{autoencoder_forward.1} parent=1 // pred_region
      _
    $region25: #{autoencoder_forward.1} parent=1 // pred_fallthru
      _
    // Predicated region
    $region26: #{autoencoder_forward.1} parent=1 // pred_check
      _
    $region27: #{autoencoder_forward.1} parent=1 // pred_check_branch
      %36 = sbr.rel (0) target = $region29
    $region28: #{autoencoder_forward.1} parent=1 // pred_region
      _
    $region29: #{autoencoder_forward.1} parent=1 // pred_fallthru
      _
    // Predicated region
    $region30: #{autoencoder_forward.1} parent=1 // pred_check
      _
    $region31: #{autoencoder_forward.1} parent=1 // pred_check_branch
      %38 = sbr.rel (0) target = $region33
    $region32: #{autoencoder_forward.1} parent=1 // pred_region
      _
    $region33: #{autoencoder_forward.1} parent=1 // pred_fallthru
      _
    // Predicated region
    $region34: #{autoencoder_forward.1} parent=1 // pred_check
      _
    $region35: #{autoencoder_forward.1} parent=1 // pred_check_branch
      %40 = sbr.rel (0) target = $region37
    $region36: #{autoencoder_forward.1} parent=1 // pred_region
      _
    $region37: #{autoencoder_forward.1} parent=1 // pred_fallthru
      _
    // Predicated region
    $region38: #{autoencoder_forward.1} parent=1 // pred_check
      _
    $region39: #{autoencoder_forward.1} parent=1 // pred_check_branch
      %42 = sbr.rel (0) target = $region41
    $region40: #{autoencoder_forward.1} parent=1 // pred_region
      _
    $region41: #{autoencoder_forward.1} parent=1 // pred_fallthru
      _
    // Predicated region
    $region42: #{autoencoder_forward.1} parent=1 // pred_check
      _
    $region43: #{autoencoder_forward.1} parent=1 // pred_check_branch
      %44 = sbr.rel (0) target = $region45
    $region44: #{autoencoder_forward.1} parent=1 // pred_region
      _
    $region45: #{autoencoder_forward.1} parent=1 // pred_fallthru
      _
    // Predicated region
    $region46: #{autoencoder_forward.1} parent=1 // pred_check
      _
    $region47: #{autoencoder_forward.1} parent=1 // pred_check_branch
      %46 = sbr.rel (0) target = $region49
    $region48: #{autoencoder_forward.1} parent=1 // pred_region
      _
    $region49: #{autoencoder_forward.1} parent=1 // pred_fallthru
      _
    // Predicated region
    $region50: #{autoencoder_forward.1} parent=1 // pred_check
      _
    $region51: #{autoencoder_forward.1} parent=1 // pred_check_branch
      %48 = sbr.rel (0) target = $region53
    $region52: #{autoencoder_forward.1} parent=1 // pred_region
      _
    $region53: #{autoencoder_forward.1} parent=1 // pred_fallthru
      _
    // Predicated region
    $region54: #{autoencoder_forward.1} parent=1 // pred_check
      _
    $region55: #{autoencoder_forward.1} parent=1 // pred_check_branch
      %50 = sbr.rel (0) target = $region57
    $region56: #{autoencoder_forward.1} parent=1 // pred_region
      _
    $region57: #{autoencoder_forward.1} parent=1 // pred_fallthru
      _
    // Predicated region
    $region58: #{autoencoder_forward.1} parent=1 // pred_check
      _
    $region59: #{autoencoder_forward.1} parent=1 // pred_check_branch
      %52 = sbr.rel (0) target = $region61
    $region60: #{autoencoder_forward.1} parent=1 // pred_region
      _
    $region61: #{autoencoder_forward.1} parent=1 // pred_fallthru
      _
    // Predicated region
    $region62: #{autoencoder_forward.1} parent=1 // pred_check
      _
    $region63: #{autoencoder_forward.1} parent=1 // pred_check_branch
      %54 = sbr.rel (0) target = $region65
    $region64: #{autoencoder_forward.1} parent=1 // pred_region
      _
    $region65: #{autoencoder_forward.1} parent=1 // pred_fallthru
      _
    // Predicated region
    $region66: #{autoencoder_forward.1} parent=1 // pred_check
      _
    $region67: #{autoencoder_forward.1} parent=1 // pred_check_branch
      %56 = sbr.rel (0) target = $region69
    $region68: #{autoencoder_forward.1} parent=1 // pred_region
      _
    $region69: #{autoencoder_forward.1} parent=1 // pred_fallthru
      _
    %v58 = vld [vmem:[%s0] sm:$0xff]
    %v59 = vld [vmem:[%s0 + $0x8] sm:$0xff]
    %v60 = vld [vmem:[%s0 + $0x10] sm:$0xff]
    %v61 = vld [vmem:[%s0 + $0x18] sm:$0xf]
    %v62 = vld [vmem:[%s1] sm:$0xf]
    %v63 = vld [vmem:[%s1 + $0x4] sm:$0xf]
    %v64 = vld [vmem:[%s1 + $0x8] sm:$0xf]
    %v65 = vld [vmem:[%s1 + $0xc] sm:$0xf]
    %v66 = vld [vmem:[%s1 + $0x10] sm:$0xf]
    %v67 = vld [vmem:[%s1 + $0x14] sm:$0xf]
    %v68 = vld [vmem:[%s1 + $0x18] sm:$0xf]
    %v69 = vld [vmem:[%s1 + $0x1c] sm:$0xf]
    %v70 = vld [vmem:[%s1 + $0x20] sm:$0xf]
    %v71 = vld [vmem:[%s1 + $0x24] sm:$0xf]
    %v72 = vld [vmem:[%s1 + $0x28] sm:$0xf]
    %v73 = vld [vmem:[%s1 + $0x2c] sm:$0xf]
    %v74 = vld [vmem:[%s1 + $0x30] sm:$0xf]
    %v75 = vld [vmem:[%s1 + $0x34] sm:$0xf]
    %v76 = vld [vmem:[%s1 + $0x38] sm:$0xf]
    %v77 = vld [vmem:[%s1 + $0x3c] sm:$0xf]
    %v78 = vld [vmem:[%s1 + $0x40] sm:$0xf]
    %v79 = vld [vmem:[%s1 + $0x44] sm:$0xf]
    %v80 = vld [vmem:[%s1 + $0x48] sm:$0xf]
    %v81 = vld [vmem:[%s1 + $0x4c] sm:$0xf]
    %v82 = vld [vmem:[%s1 + $0x50] sm:$0xf]
    %v83 = vld [vmem:[%s1 + $0x54] sm:$0xf]
    %v84 = vld [vmem:[%s1 + $0x58] sm:$0xf]
    %v85 = vld [vmem:[%s1 + $0x5c] sm:$0xf]
    %v86 = vld [vmem:[%s1 + $0x60] sm:$0xf]
    %v87 = vld [vmem:[%s1 + $0x64] sm:$0xf]
    %v88 = vld [vmem:[%s1 + $0x68] sm:$0xf]
    %v89 = vld [vmem:[%s1 + $0x6c] sm:$0xf]
    %v90 = vld [vmem:[%s1 + $0x70] sm:$0xf]
    %v91 = vld [vmem:[%s1 + $0x74] sm:$0xf]
    %v92 = vld [vmem:[%s1 + $0x78] sm:$0xf]
    %v93 = vld [vmem:[%s1 + $0x7c] sm:$0xf]
    %v94 = vld [vmem:[%s1 + $0x80] sm:$0xf]
    %v95 = vld [vmem:[%s1 + $0x84] sm:$0xf]
    %v96 = vld [vmem:[%s1 + $0x88] sm:$0xf]
    %v97 = vld [vmem:[%s1 + $0x8c] sm:$0xf]
    %v98 = vld [vmem:[%s1 + $0x90] sm:$0xf]
    %v99 = vld [vmem:[%s1 + $0x94] sm:$0xf]
    %v100 = vld [vmem:[%s1 + $0x98] sm:$0xf]
    %v101 = vld [vmem:[%s1 + $0x9c] sm:$0xf]
    %v102 = vld [vmem:[%s1 + $0xa0] sm:$0xf]
    %v103 = vld [vmem:[%s1 + $0xa4] sm:$0xf]
    %v104 = vld [vmem:[%s1 + $0xa8] sm:$0xf]
    %v105 = vld [vmem:[%s1 + $0xac] sm:$0xf]
    %v106 = vld [vmem:[%s1 + $0xb0] sm:$0xf]
    %v107 = vld [vmem:[%s1 + $0xb4] sm:$0xf]
    %v108 = vld [vmem:[%s1 + $0xb8] sm:$0xf]
    %v109 = vld [vmem:[%s1 + $0xbc] sm:$0xf]
    %v110 = vld [vmem:[%s1 + $0xc0] sm:$0xf]
    %v111 = vld [vmem:[%s1 + $0xc4] sm:$0xf]
    %v112 = vld [vmem:[%s1 + $0xc8] sm:$0xf]
    %v113 = vld [vmem:[%s1 + $0xcc] sm:$0xf]
    %v114 = vld [vmem:[%s1 + $0xd0] sm:$0xf]
    %v115 = vld [vmem:[%s1 + $0xd4] sm:$0xf]
    %v116 = vld [vmem:[%s1 + $0xd8] sm:$0xf]
    %v117 = vld [vmem:[%s1 + $0xdc] sm:$0xf]
    %v118 = vld [vmem:[%s1 + $0xe0] sm:$0xf]
    %v119 = vld [vmem:[%s1 + $0xe4] sm:$0xf]
    %v120 = vld [vmem:[%s1 + $0xe8] sm:$0xf]
    %v121 = vld [vmem:[%s1 + $0xec] sm:$0xf]
    %v122 = vld [vmem:[%s1 + $0xf0] sm:$0xf]
    %v123 = vld [vmem:[%s1 + $0xf4] sm:$0xf]
    %v124 = vld [vmem:[%s1 + $0xf8] sm:$0xf]
    %v125 = vld [vmem:[%s1 + $0xfc] sm:$0xf]
    %v126 = vld [vmem:[%s1 + $0x100] sm:$0xf]
    %v127 = vld [vmem:[%s1 + $0x104] sm:$0xf]
    %v128 = vld [vmem:[%s1 + $0x108] sm:$0xf]
    %v129 = vld [vmem:[%s1 + $0x10c] sm:$0xf]
    %v130 = vld [vmem:[%s1 + $0x110] sm:$0xf]
    %v131 = vld [vmem:[%s1 + $0x114] sm:$0xf]
    %v132 = vld [vmem:[%s1 + $0x118] sm:$0xf]
    %v133 = vld [vmem:[%s1 + $0x11c] sm:$0xf]
    %v134 = vld [vmem:[%s1 + $0x120] sm:$0xf]
    %v135 = vld [vmem:[%s1 + $0x124] sm:$0xf]
    %v136 = vld [vmem:[%s1 + $0x128] sm:$0xf]
    %v137 = vld [vmem:[%s1 + $0x12c] sm:$0xf]
    %v138 = vld [vmem:[%s1 + $0x130] sm:$0xf]
    %v139 = vld [vmem:[%s1 + $0x134] sm:$0xf]
    %v140 = vld [vmem:[%s1 + $0x138] sm:$0xf]
    %v141 = vld [vmem:[%s1 + $0x13c] sm:$0xf]
    %v142 = vld [vmem:[%s1 + $0x140] sm:$0xf]
    %v143 = vld [vmem:[%s1 + $0x144] sm:$0xf]
    %v144 = vld [vmem:[%s1 + $0x148] sm:$0xf]
    %v145 = vld [vmem:[%s1 + $0x14c] sm:$0xf]
    %v146 = vld [vmem:[%s1 + $0x150] sm:$0xf]
    %v147 = vld [vmem:[%s1 + $0x154] sm:$0xf]
    %v148 = vld [vmem:[%s1 + $0x158] sm:$0xf]
    %v149 = vld [vmem:[%s1 + $0x15c] sm:$0xf]
    %v150 = vld [vmem:[%s1 + $0x160] sm:$0xf]
    %v151 = vld [vmem:[%s1 + $0x164] sm:$0xf]
    %v152 = vld [vmem:[%s1 + $0x168] sm:$0xf]
    %v153 = vld [vmem:[%s1 + $0x16c] sm:$0xf]
    %v154 = vld [vmem:[%s1 + $0x170] sm:$0xf]
    %v155 = vld [vmem:[%s1 + $0x174] sm:$0xf]
    %v156 = vld [vmem:[%s1 + $0x178] sm:$0xf]
    %v157 = vld [vmem:[%s1 + $0x17c] sm:$0xf]
    %v158 = vld [vmem:[%s1 + $0x180] sm:$0xf]
    %v159 = vld [vmem:[%s1 + $0x184] sm:$0xf]
    %v160 = vld [vmem:[%s2] sm:$0x1]
    %v162 = vlaneseq
    %v163 = vshrl.u32 %v162, 7
    %v164 = vsub.s32 0, %v163
    %v165 = vrot.slane %v160, %v164
    %v171 = vunpack.c.l.b16 %v58
    %v172 = vunpack.c.h.b16 %v58
    %v173 = vunpack.c.l.b16 %v59
    %v174 = vunpack.c.h.b16 %v59
    %v175 = vunpack.c.l.b16 %v60
    %v176 = vunpack.c.h.b16 %v60
    %v177 = vunpack.c.l.b16 %v61
    %v178 = vpack.c.b16 %v171, %v171
    %v179 = vpack.c.b16 %v172, %v172
    %v180 = vpack.c.b16 %v173, %v173
    %v181 = vpack.c.b16 %v174, %v174
    %v182 = vpack.c.b16 %v175, %v175
    %v183 = vpack.c.b16 %v176, %v176
    %v184 = vpack.c.b16 %v177, %v177
    %v289 = vunpack.c.l.b16 %v62
    %v290 = vunpack.c.l.b16 %v63
    %v291 = vunpack.c.l.b16 %v64
    %v292 = vunpack.c.l.b16 %v65
    %v293 = vunpack.c.l.b16 %v66
    %v294 = vunpack.c.l.b16 %v67
    %v295 = vunpack.c.l.b16 %v68
    %v296 = vunpack.c.l.b16 %v69
    %v297 = vunpack.c.l.b16 %v70
    %v298 = vunpack.c.l.b16 %v71
    %v299 = vunpack.c.l.b16 %v72
    %v300 = vunpack.c.l.b16 %v73
    %v301 = vunpack.c.l.b16 %v74
    %v302 = vunpack.c.l.b16 %v75
    %v303 = vunpack.c.l.b16 %v76
    %v304 = vunpack.c.l.b16 %v77
    %v305 = vunpack.c.l.b16 %v78
    %v306 = vunpack.c.l.b16 %v79
    %v307 = vunpack.c.l.b16 %v80
    %v308 = vunpack.c.l.b16 %v81
    %v309 = vunpack.c.l.b16 %v82
    %v310 = vunpack.c.l.b16 %v83
    %v311 = vunpack.c.l.b16 %v84
    %v312 = vunpack.c.l.b16 %v85
    %v313 = vunpack.c.l.b16 %v86
    %v314 = vunpack.c.l.b16 %v87
    %v315 = vunpack.c.l.b16 %v88
    %v316 = vunpack.c.l.b16 %v89
    %v317 = vunpack.c.l.b16 %v90
    %v318 = vunpack.c.l.b16 %v91
    %v319 = vunpack.c.l.b16 %v92
    %v320 = vunpack.c.l.b16 %v93
    %v321 = vunpack.c.l.b16 %v94
    %v322 = vunpack.c.l.b16 %v95
    %v323 = vunpack.c.l.b16 %v96
    %v324 = vunpack.c.l.b16 %v97
    %v325 = vunpack.c.l.b16 %v98
    %v326 = vunpack.c.l.b16 %v99
    %v327 = vunpack.c.l.b16 %v100
    %v328 = vunpack.c.l.b16 %v101
    %v329 = vunpack.c.l.b16 %v102
    %v330 = vunpack.c.l.b16 %v103
    %v331 = vunpack.c.l.b16 %v104
    %v332 = vunpack.c.l.b16 %v105
    %v333 = vunpack.c.l.b16 %v106
    %v334 = vunpack.c.l.b16 %v107
    %v335 = vunpack.c.l.b16 %v108
    %v336 = vunpack.c.l.b16 %v109
    %v337 = vunpack.c.l.b16 %v110
    %v338 = vunpack.c.l.b16 %v111
    %v339 = vunpack.c.l.b16 %v112
    %v340 = vunpack.c.l.b16 %v113
    %v341 = vunpack.c.l.b16 %v114
    %v342 = vunpack.c.l.b16 %v115
    %v343 = vunpack.c.l.b16 %v116
    %v344 = vunpack.c.l.b16 %v117
    %v345 = vunpack.c.l.b16 %v118
    %v346 = vunpack.c.l.b16 %v119
    %v347 = vunpack.c.l.b16 %v120
    %v348 = vunpack.c.l.b16 %v121
    %v349 = vunpack.c.l.b16 %v122
    %v350 = vunpack.c.l.b16 %v123
    %v351 = vunpack.c.l.b16 %v124
    %v352 = vunpack.c.l.b16 %v125
    %v353 = vunpack.c.l.b16 %v126
    %v354 = vunpack.c.l.b16 %v127
    %v355 = vunpack.c.l.b16 %v128
    %v356 = vunpack.c.l.b16 %v129
    %v357 = vunpack.c.l.b16 %v130
    %v358 = vunpack.c.l.b16 %v131
    %v359 = vunpack.c.l.b16 %v132
    %v360 = vunpack.c.l.b16 %v133
    %v361 = vunpack.c.l.b16 %v134
    %v362 = vunpack.c.l.b16 %v135
    %v363 = vunpack.c.l.b16 %v136
    %v364 = vunpack.c.l.b16 %v137
    %v365 = vunpack.c.l.b16 %v138
    %v366 = vunpack.c.l.b16 %v139
    %v367 = vunpack.c.l.b16 %v140
    %v368 = vunpack.c.l.b16 %v141
    %v369 = vunpack.c.l.b16 %v142
    %v370 = vunpack.c.l.b16 %v143
    %v371 = vunpack.c.l.b16 %v144
    %v372 = vunpack.c.l.b16 %v145
    %v373 = vunpack.c.l.b16 %v146
    %v374 = vunpack.c.l.b16 %v147
    %v375 = vunpack.c.l.b16 %v148
    %v376 = vunpack.c.l.b16 %v149
    %v377 = vunpack.c.l.b16 %v150
    %v378 = vunpack.c.l.b16 %v151
    %v379 = vunpack.c.l.b16 %v152
    %v380 = vunpack.c.l.b16 %v153
    %v381 = vunpack.c.l.b16 %v154
    %v382 = vunpack.c.l.b16 %v155
    %v383 = vunpack.c.l.b16 %v156
    %v384 = vunpack.c.l.b16 %v157
    %v385 = vunpack.c.l.b16 %v158
    %v386 = vunpack.c.l.b16 %v159
    %v387 = vpack.c.b16 %v290, %v289
    %v388 = vpack.c.b16 %v292, %v291
    %v389 = vpack.c.b16 %v294, %v293
    %v390 = vpack.c.b16 %v296, %v295
    %v391 = vpack.c.b16 %v298, %v297
    %v392 = vpack.c.b16 %v300, %v299
    %v393 = vpack.c.b16 %v302, %v301
    %v394 = vpack.c.b16 %v304, %v303
    %v395 = vpack.c.b16 %v306, %v305
    %v396 = vpack.c.b16 %v308, %v307
    %v397 = vpack.c.b16 %v310, %v309
    %v398 = vpack.c.b16 %v312, %v311
    %v399 = vpack.c.b16 %v314, %v313
    %v400 = vpack.c.b16 %v316, %v315
    %v401 = vpack.c.b16 %v318, %v317
    %v402 = vpack.c.b16 %v320, %v319
    %v403 = vpack.c.b16 %v322, %v321
    %v404 = vpack.c.b16 %v324, %v323
    %v405 = vpack.c.b16 %v326, %v325
    %v406 = vpack.c.b16 %v328, %v327
    %v407 = vpack.c.b16 %v330, %v329
    %v408 = vpack.c.b16 %v332, %v331
    %v409 = vpack.c.b16 %v334, %v333
    %v410 = vpack.c.b16 %v336, %v335
    %v411 = vpack.c.b16 %v338, %v337
    %v412 = vpack.c.b16 %v340, %v339
    %v413 = vpack.c.b16 %v342, %v341
    %v414 = vpack.c.b16 %v344, %v343
    %v415 = vpack.c.b16 %v346, %v345
    %v416 = vpack.c.b16 %v348, %v347
    %v417 = vpack.c.b16 %v350, %v349
    %v418 = vpack.c.b16 %v352, %v351
    %v419 = vpack.c.b16 %v354, %v353
    %v420 = vpack.c.b16 %v356, %v355
    %v421 = vpack.c.b16 %v358, %v357
    %v422 = vpack.c.b16 %v360, %v359
    %v423 = vpack.c.b16 %v362, %v361
    %v424 = vpack.c.b16 %v364, %v363
    %v425 = vpack.c.b16 %v366, %v365
    %v426 = vpack.c.b16 %v368, %v367
    %v427 = vpack.c.b16 %v370, %v369
    %v428 = vpack.c.b16 %v372, %v371
    %v429 = vpack.c.b16 %v374, %v373
    %v430 = vpack.c.b16 %v376, %v375
    %v431 = vpack.c.b16 %v378, %v377
    %v432 = vpack.c.b16 %v380, %v379
    %v433 = vpack.c.b16 %v382, %v381
    %v434 = vpack.c.b16 %v384, %v383
    %v435 = vpack.c.b16 %v386, %v385
    %vm485 = vcmask 130048
    %v487 = vsel %vm485, %v184, 0
    %489 = vmatprep.subr.bf16.mxu0 0
    %490 = vmatpush1.bf16.msra.mxu0 %v394
    %491 = vmatprep.subr.bf16.mxu0 0
    %492 = vmatpush1.bf16.msra.mxu0 %v393
    %493 = vmatprep.subr.bf16.mxu0 0
    %494 = vmatpush1.bf16.msra.mxu0 %v392
    %495 = vmatprep.subr.bf16.mxu0 0
    %496 = vmatpush1.bf16.msra.mxu0 %v391
    %497 = vmatprep.subr.bf16.mxu0 0
    %498 = vmatpush1.bf16.msra.mxu0 %v390
    %499 = vmatprep.subr.bf16.mxu0 0
    %500 = vmatpush1.bf16.msra.mxu0 %v389
    %501 = vmatprep.subr.bf16.mxu0 0
    %502 = vmatpush1.bf16.msra.mxu0 %v388
    %503 = vmatprep.subr.bf16.mxu0 0
    %504 = vmatpush1.bf16.msra.mxu0 %v387
    %505 = vmatprep.subr.bf16.mxu0 0
    %506 = vmatpush2.bf16.msra.mxu0 %v402
    %507 = vmatprep.subr.bf16.mxu0 0
    %508 = vmatpush2.bf16.msra.mxu0 %v401
    %509 = vmatprep.subr.bf16.mxu0 0
    %510 = vmatpush2.bf16.msra.mxu0 %v400
    %511 = vmatprep.subr.bf16.mxu0 0
    %512 = vmatpush2.bf16.msra.mxu0 %v399
    %513 = vmatprep.subr.bf16.mxu0 0
    %514 = vmatpush2.bf16.msra.mxu0 %v398
    %515 = vmatprep.subr.bf16.mxu0 0
    %516 = vmatpush2.bf16.msra.mxu0 %v397
    %517 = vmatprep.subr.bf16.mxu0 0
    %518 = vmatpush2.bf16.msra.mxu0 %v396
    %519 = vmatprep.subr.bf16.mxu0 0
    %520 = vmatpush2.bf16.msra.mxu0 %v395
    %521 = vmatprep.mubr.bf16.mxu0 %v179
    %522 = vmatmul.mubr.bf16.gmra.mxu0 %v178
    %v523 = vpop.f32.mrf.mxu0
    %v524 = vadd.f32 %v165, %v523
    %v525 = vpop.f32.mrf.mxu0
    %v526 = vpop.f32.mrf.mxu0
    %v527 = vpop.f32.mrf.mxu0
    %528 = vdwg.mxu0
    %529 = vmatprep.subr.bf16.mxu0 0
    %530 = vmatpush1.bf16.msra.mxu0 %v410
    %531 = vmatprep.subr.bf16.mxu0 0
    %532 = vmatpush1.bf16.msra.mxu0 %v409
    %533 = vmatprep.subr.bf16.mxu0 0
    %534 = vmatpush1.bf16.msra.mxu0 %v408
    %535 = vmatprep.subr.bf16.mxu0 0
    %536 = vmatpush1.bf16.msra.mxu0 %v407
    %537 = vmatprep.subr.bf16.mxu0 0
    %538 = vmatpush1.bf16.msra.mxu0 %v406
    %539 = vmatprep.subr.bf16.mxu0 0
    %540 = vmatpush1.bf16.msra.mxu0 %v405
    %541 = vmatprep.subr.bf16.mxu0 0
    %542 = vmatpush1.bf16.msra.mxu0 %v404
    %543 = vmatprep.subr.bf16.mxu0 0
    %544 = vmatpush1.bf16.msra.mxu0 %v403
    %545 = vmatprep.subr.bf16.mxu0 0
    %546 = vmatpush2.bf16.msra.mxu0 %v418
    %547 = vmatprep.subr.bf16.mxu0 0
    %548 = vmatpush2.bf16.msra.mxu0 %v417
    %549 = vmatprep.subr.bf16.mxu0 0
    %550 = vmatpush2.bf16.msra.mxu0 %v416
    %551 = vmatprep.subr.bf16.mxu0 0
    %552 = vmatpush2.bf16.msra.mxu0 %v415
    %553 = vmatprep.subr.bf16.mxu0 0
    %554 = vmatpush2.bf16.msra.mxu0 %v414
    %555 = vmatprep.subr.bf16.mxu0 0
    %556 = vmatpush2.bf16.msra.mxu0 %v413
    %557 = vmatprep.subr.bf16.mxu0 0
    %558 = vmatpush2.bf16.msra.mxu0 %v412
    %559 = vmatprep.subr.bf16.mxu0 0
    %560 = vmatpush2.bf16.msra.mxu0 %v411
    %561 = vmatprep.mubr.bf16.mxu0 %v181
    %562 = vmatmul.mubr.bf16.gmra.mxu0 %v180
    %v563 = vpop.f32.mrf.mxu0
    %v564 = vadd.f32 %v524, %v563
    %v565 = vpop.f32.mrf.mxu0
    %v566 = vpop.f32.mrf.mxu0
    %v567 = vpop.f32.mrf.mxu0
    %568 = vdwg.mxu0
    %569 = vmatprep.subr.bf16.mxu0 0
    %570 = vmatpush1.bf16.msra.mxu0 %v426
    %571 = vmatprep.subr.bf16.mxu0 0
    %572 = vmatpush1.bf16.msra.mxu0 %v425
    %573 = vmatprep.subr.bf16.mxu0 0
    %574 = vmatpush1.bf16.msra.mxu0 %v424
    %575 = vmatprep.subr.bf16.mxu0 0
    %576 = vmatpush1.bf16.msra.mxu0 %v423
    %577 = vmatprep.subr.bf16.mxu0 0
    %578 = vmatpush1.bf16.msra.mxu0 %v422
    %579 = vmatprep.subr.bf16.mxu0 0
    %580 = vmatpush1.bf16.msra.mxu0 %v421
    %581 = vmatprep.subr.bf16.mxu0 0
    %582 = vmatpush1.bf16.msra.mxu0 %v420
    %583 = vmatprep.subr.bf16.mxu0 0
    %584 = vmatpush1.bf16.msra.mxu0 %v419
    %585 = vmatprep.subr.bf16.mxu0 0
    %586 = vmatpush2.bf16.msra.mxu0 %v434
    %587 = vmatprep.subr.bf16.mxu0 0
    %588 = vmatpush2.bf16.msra.mxu0 %v433
    %589 = vmatprep.subr.bf16.mxu0 0
    %590 = vmatpush2.bf16.msra.mxu0 %v432
    %591 = vmatprep.subr.bf16.mxu0 0
    %592 = vmatpush2.bf16.msra.mxu0 %v431
    %593 = vmatprep.subr.bf16.mxu0 0
    %594 = vmatpush2.bf16.msra.mxu0 %v430
    %595 = vmatprep.subr.bf16.mxu0 0
    %596 = vmatpush2.bf16.msra.mxu0 %v429
    %597 = vmatprep.subr.bf16.mxu0 0
    %598 = vmatpush2.bf16.msra.mxu0 %v428
    %599 = vmatprep.subr.bf16.mxu0 0
    %600 = vmatpush2.bf16.msra.mxu0 %v427
    %601 = vmatprep.mubr.bf16.mxu0 %v183
    %602 = vmatmul.mubr.bf16.gmra.mxu0 %v182
    %v603 = vpop.f32.mrf.mxu0
    %v604 = vadd.f32 %v564, %v603
    %v605 = vpop.f32.mrf.mxu0
    %v606 = vpop.f32.mrf.mxu0
    %v607 = vpop.f32.mrf.mxu0
    %608 = vdwg.mxu0
    %609 = vmatprep.subr.bf16.mxu0 0
    %610 = vmatpush1.bf16.msra.mxu0 0
    %611 = vmatprep.subr.bf16.mxu0 0
    %612 = vmatpush1.bf16.msra.mxu0 0
    %613 = vmatprep.subr.bf16.mxu0 0
    %614 = vmatpush1.bf16.msra.mxu0 0
    %615 = vmatprep.subr.bf16.mxu0 0
    %616 = vmatpush1.bf16.msra.mxu0 0
    %617 = vmatprep.subr.bf16.mxu0 0
    %618 = vmatpush1.bf16.msra.mxu0 0
    %619 = vmatprep.subr.bf16.mxu0 0
    %620 = vmatpush1.bf16.msra.mxu0 0
    %621 = vmatprep.subr.bf16.mxu0 0
    %622 = vmatpush1.bf16.msra.mxu0 0
    %623 = vmatprep.subr.bf16.mxu0 0
    %624 = vmatpush1.bf16.msra.mxu0 %v435
    %625 = vmatprep.subr.bf16.mxu0 0
    %626 = vmatpush2.bf16.msra.mxu0 0
    %627 = vmatprep.subr.bf16.mxu0 0
    %628 = vmatpush2.bf16.msra.mxu0 0
    %629 = vmatprep.subr.bf16.mxu0 0
    %630 = vmatpush2.bf16.msra.mxu0 0
    %631 = vmatprep.subr.bf16.mxu0 0
    %632 = vmatpush2.bf16.msra.mxu0 0
    %633 = vmatprep.subr.bf16.mxu0 0
    %634 = vmatpush2.bf16.msra.mxu0 0
    %635 = vmatprep.subr.bf16.mxu0 0
    %636 = vmatpush2.bf16.msra.mxu0 0
    %637 = vmatprep.subr.bf16.mxu0 0
    %638 = vmatpush2.bf16.msra.mxu0 0
    %639 = vmatprep.subr.bf16.mxu0 0
    %640 = vmatpush2.bf16.msra.mxu0 0
    %641 = vmatprep.mubr.bf16.mxu0 0
    %642 = vmatmul.mubr.bf16.gmra.mxu0 %v487
    %v643 = vpop.f32.mrf.mxu0
    %v644 = vadd.f32 %v604, %v643
    %v645 = vpop.f32.mrf.mxu0
    %v646 = vpop.f32.mrf.mxu0
    %v647 = vpop.f32.mrf.mxu0
    %648 = vdwg.mxu0
    %v649 = vmax.f32 %v644, 0.0
    %v650 = vpack.c.bf16 %v649, %v649
    %v651 = vld [vmem:[%s3] sm:$0xf]
    %v652 = vld [vmem:[%s3 + $0x4] sm:$0xf]
    %v653 = vld [vmem:[%s3 + $0x8] sm:$0xf]
    %v654 = vld [vmem:[%s3 + $0xc] sm:$0xf]
    %v655 = vld [vmem:[%s3 + $0x10] sm:$0xf]
    %v656 = vld [vmem:[%s3 + $0x14] sm:$0xf]
    %v657 = vld [vmem:[%s3 + $0x18] sm:$0xf]
    %v658 = vld [vmem:[%s3 + $0x1c] sm:$0xf]
    %v659 = vld [vmem:[%s4] sm:$0x1]
    %v661 = vlaneseq
    %v662 = vshrl.u32 %v661, 7
    %v663 = vsub.s32 0, %v662
    %v664 = vrot.slane %v659, %v663
    %v674 = vunpack.c.l.b16 %v651
    %v675 = vunpack.c.l.b16 %v652
    %v676 = vunpack.c.l.b16 %v653
    %v677 = vunpack.c.l.b16 %v654
    %v678 = vunpack.c.l.b16 %v655
    %v679 = vunpack.c.l.b16 %v656
    %v680 = vunpack.c.l.b16 %v657
    %v681 = vunpack.c.l.b16 %v658
    %v682 = vpack.c.b16 %v675, %v674
    %v683 = vpack.c.b16 %v677, %v676
    %v684 = vpack.c.b16 %v679, %v678
    %v685 = vpack.c.b16 %v681, %v680
    %vm690 = vcmask 523264
    %v692 = vsel %vm690, %v650, 0
    %694 = vmatprep.subr.bf16.mxu0 0
    %695 = vmatpush1.bf16.msra.mxu0 0
    %696 = vmatprep.subr.bf16.mxu0 0
    %697 = vmatpush1.bf16.msra.mxu0 0
    %698 = vmatprep.subr.bf16.mxu0 0
    %699 = vmatpush1.bf16.msra.mxu0 0
    %700 = vmatprep.subr.bf16.mxu0 0
    %701 = vmatpush1.bf16.msra.mxu0 0
    %702 = vmatprep.subr.bf16.mxu0 0
    %703 = vmatpush1.bf16.msra.mxu0 %v685
    %704 = vmatprep.subr.bf16.mxu0 0
    %705 = vmatpush1.bf16.msra.mxu0 %v684
    %706 = vmatprep.subr.bf16.mxu0 0
    %707 = vmatpush1.bf16.msra.mxu0 %v683
    %708 = vmatprep.subr.bf16.mxu0 0
    %709 = vmatpush1.bf16.msra.mxu0 %v682
    %710 = vmatprep.subr.bf16.mxu0 0
    %711 = vmatpush2.bf16.msra.mxu0 0
    %712 = vmatprep.subr.bf16.mxu0 0
    %713 = vmatpush2.bf16.msra.mxu0 0
    %714 = vmatprep.subr.bf16.mxu0 0
    %715 = vmatpush2.bf16.msra.mxu0 0
    %716 = vmatprep.subr.bf16.mxu0 0
    %717 = vmatpush2.bf16.msra.mxu0 0
    %718 = vmatprep.subr.bf16.mxu0 0
    %719 = vmatpush2.bf16.msra.mxu0 0
    %720 = vmatprep.subr.bf16.mxu0 0
    %721 = vmatpush2.bf16.msra.mxu0 0
    %722 = vmatprep.subr.bf16.mxu0 0
    %723 = vmatpush2.bf16.msra.mxu0 0
    %724 = vmatprep.subr.bf16.mxu0 0
    %725 = vmatpush2.bf16.msra.mxu0 0
    %726 = vmatprep.mubr.bf16.mxu0 0
    %727 = vmatmul.mubr.bf16.gmra.mxu0 %v692
    %v728 = vpop.f32.mrf.mxu0
    %v729 = vadd.f32 %v664, %v728
    %v730 = vpop.f32.mrf.mxu0
    %v731 = vpop.f32.mrf.mxu0
    %v732 = vpop.f32.mrf.mxu0
    %733 = vdwg.mxu0
    %v734 = vmax.f32 %v729, 0.0
    %v735 = vpack.c.bf16 %v734, %v734
    %v736 = vld [vmem:[%s5] sm:$0xf]
    %v737 = vld [vmem:[%s5 + $0x4] sm:$0xf]
    %v738 = vld [vmem:[%s5 + $0x8] sm:$0xf]
    %v739 = vld [vmem:[%s5 + $0xc] sm:$0xf]
    %v740 = vld [vmem:[%s6] sm:$0x1]
    %v742 = vlaneseq
    %v743 = vshrl.u32 %v742, 7
    %v744 = vsub.s32 0, %v743
    %v745 = vrot.slane %v740, %v744
    %v751 = vunpack.c.l.b16 %v736
    %v752 = vunpack.c.l.b16 %v737
    %v753 = vunpack.c.l.b16 %v738
    %v754 = vunpack.c.l.b16 %v739
    %v755 = vpack.c.b16 %v752, %v751
    %v756 = vpack.c.b16 %v754, %v753
    %vm759 = vcmask 261120
    %v761 = vsel %vm759, %v735, 0
    %763 = vmatprep.subr.bf16.mxu0 0
    %764 = vmatpush1.bf16.msra.mxu0 0
    %765 = vmatprep.subr.bf16.mxu0 0
    %766 = vmatpush1.bf16.msra.mxu0 0
    %767 = vmatprep.subr.bf16.mxu0 0
    %768 = vmatpush1.bf16.msra.mxu0 0
    %769 = vmatprep.subr.bf16.mxu0 0
    %770 = vmatpush1.bf16.msra.mxu0 0
    %771 = vmatprep.subr.bf16.mxu0 0
    %772 = vmatpush1.bf16.msra.mxu0 0
    %773 = vmatprep.subr.bf16.mxu0 0
    %774 = vmatpush1.bf16.msra.mxu0 0
    %775 = vmatprep.subr.bf16.mxu0 0
    %776 = vmatpush1.bf16.msra.mxu0 %v756
    %777 = vmatprep.subr.bf16.mxu0 0
    %778 = vmatpush1.bf16.msra.mxu0 %v755
    %779 = vmatprep.subr.bf16.mxu0 0
    %780 = vmatpush2.bf16.msra.mxu0 0
    %781 = vmatprep.subr.bf16.mxu0 0
    %782 = vmatpush2.bf16.msra.mxu0 0
    %783 = vmatprep.subr.bf16.mxu0 0
    %784 = vmatpush2.bf16.msra.mxu0 0
    %785 = vmatprep.subr.bf16.mxu0 0
    %786 = vmatpush2.bf16.msra.mxu0 0
    %787 = vmatprep.subr.bf16.mxu0 0
    %788 = vmatpush2.bf16.msra.mxu0 0
    %789 = vmatprep.subr.bf16.mxu0 0
    %790 = vmatpush2.bf16.msra.mxu0 0
    %791 = vmatprep.subr.bf16.mxu0 0
    %792 = vmatpush2.bf16.msra.mxu0 0
    %793 = vmatprep.subr.bf16.mxu0 0
    %794 = vmatpush2.bf16.msra.mxu0 0
    %795 = vmatprep.mubr.bf16.mxu0 0
    %796 = vmatmul.mubr.bf16.gmra.mxu0 %v761
    %v797 = vpop.f32.mrf.mxu0
    %v798 = vadd.f32 %v745, %v797
    %v799 = vpop.f32.mrf.mxu0
    %v800 = vpop.f32.mrf.mxu0
    %v801 = vpop.f32.mrf.mxu0
    %802 = vdwg.mxu0
    %v803 = vmax.f32 %v798, 0.0
    %v804 = vpack.c.bf16 %v803, %v803
    %v805 = vld [vmem:[%s7] sm:$0xf]
    %v806 = vld [vmem:[%s7 + $0x4] sm:$0xf]
    %v807 = vld [vmem:[%s8] sm:$0x1]
    %v809 = vlaneseq
    %v810 = vshrl.u32 %v809, 7
    %v811 = vsub.s32 0, %v810
    %v812 = vrot.slane %v807, %v811
    %v816 = vunpack.c.l.b16 %v805
    %v817 = vunpack.c.l.b16 %v806
    %v818 = vpack.c.b16 %v817, %v816
    %v821 = vsel %vm485, %v804, 0
    %823 = vmatprep.subr.bf16.mxu0 0
    %824 = vmatpush1.bf16.msra.mxu0 0
    %825 = vmatprep.subr.bf16.mxu0 0
    %826 = vmatpush1.bf16.msra.mxu0 0
    %827 = vmatprep.subr.bf16.mxu0 0
    %828 = vmatpush1.bf16.msra.mxu0 0
    %829 = vmatprep.subr.bf16.mxu0 0
    %830 = vmatpush1.bf16.msra.mxu0 0
    %831 = vmatprep.subr.bf16.mxu0 0
    %832 = vmatpush1.bf16.msra.mxu0 0
    %833 = vmatprep.subr.bf16.mxu0 0
    %834 = vmatpush1.bf16.msra.mxu0 0
    %835 = vmatprep.subr.bf16.mxu0 0
    %836 = vmatpush1.bf16.msra.mxu0 0
    %837 = vmatprep.subr.bf16.mxu0 0
    %838 = vmatpush1.bf16.msra.mxu0 %v818
    %839 = vmatprep.subr.bf16.mxu0 0
    %840 = vmatpush2.bf16.msra.mxu0 0
    %841 = vmatprep.subr.bf16.mxu0 0
    %842 = vmatpush2.bf16.msra.mxu0 0
    %843 = vmatprep.subr.bf16.mxu0 0
    %844 = vmatpush2.bf16.msra.mxu0 0
    %845 = vmatprep.subr.bf16.mxu0 0
    %846 = vmatpush2.bf16.msra.mxu0 0
    %847 = vmatprep.subr.bf16.mxu0 0
    %848 = vmatpush2.bf16.msra.mxu0 0
    %849 = vmatprep.subr.bf16.mxu0 0
    %850 = vmatpush2.bf16.msra.mxu0 0
    %851 = vmatprep.subr.bf16.mxu0 0
    %852 = vmatpush2.bf16.msra.mxu0 0
    %853 = vmatprep.subr.bf16.mxu0 0
    %854 = vmatpush2.bf16.msra.mxu0 0
    %855 = vmatprep.mubr.bf16.mxu0 0
    %856 = vmatmul.mubr.bf16.gmra.mxu0 %v821
    %v857 = vpop.f32.mrf.mxu0
    %v858 = vadd.f32 %v812, %v857
    %v859 = vpop.f32.mrf.mxu0
    %v860 = vpop.f32.mrf.mxu0
    %v861 = vpop.f32.mrf.mxu0
    %862 = vdwg.mxu0
    %v863 = vpack.c.bf16 %v858, %v858
    %v864 = vld [vmem:[%s9] sm:$0xf]
    %v865 = vld [vmem:[%s10] sm:$0x1]
    %v867 = vlaneseq
    %v868 = vshrl.u32 %v867, 7
    %v869 = vsub.s32 0, %v868
    %v870 = vrot.slane %v865, %v869
    %vm872 = vcmask 64512
    %v874 = vsel %vm872, %v863, 0
    %vm876 = vcmask 1043456
    %v878 = vsel %vm876, %v864, 0
    %880 = vmatprep.subr.bf16.mxu0 0
    %881 = vmatpush1.bf16.msra.mxu0 0
    %882 = vmatprep.subr.bf16.mxu0 0
    %883 = vmatpush1.bf16.msra.mxu0 0
    %884 = vmatprep.subr.bf16.mxu0 0
    %885 = vmatpush1.bf16.msra.mxu0 0
    %886 = vmatprep.subr.bf16.mxu0 0
    %887 = vmatpush1.bf16.msra.mxu0 0
    %888 = vmatprep.subr.bf16.mxu0 0
    %889 = vmatpush1.bf16.msra.mxu0 0
    %890 = vmatprep.subr.bf16.mxu0 0
    %891 = vmatpush1.bf16.msra.mxu0 0
    %892 = vmatprep.subr.bf16.mxu0 0
    %893 = vmatpush1.bf16.msra.mxu0 0
    %894 = vmatprep.subr.bf16.mxu0 0
    %895 = vmatpush1.bf16.msra.mxu0 %v878
    %896 = vmatprep.subr.bf16.mxu0 0
    %897 = vmatpush2.bf16.msra.mxu0 0
    %898 = vmatprep.subr.bf16.mxu0 0
    %899 = vmatpush2.bf16.msra.mxu0 0
    %900 = vmatprep.subr.bf16.mxu0 0
    %901 = vmatpush2.bf16.msra.mxu0 0
    %902 = vmatprep.subr.bf16.mxu0 0
    %903 = vmatpush2.bf16.msra.mxu0 0
    %904 = vmatprep.subr.bf16.mxu0 0
    %905 = vmatpush2.bf16.msra.mxu0 0
    %906 = vmatprep.subr.bf16.mxu0 0
    %907 = vmatpush2.bf16.msra.mxu0 0
    %908 = vmatprep.subr.bf16.mxu0 0
    %909 = vmatpush2.bf16.msra.mxu0 0
    %910 = vmatprep.subr.bf16.mxu0 0
    %911 = vmatpush2.bf16.msra.mxu0 0
    %912 = vmatprep.mubr.bf16.mxu0 0
    %913 = vmatmul.mubr.bf16.gmra.mxu0 %v874
    %v914 = vpop.f32.mrf.mxu0
    %v915 = vadd.f32 %v870, %v914
    %v916 = vpop.f32.mrf.mxu0
    %v917 = vpop.f32.mrf.mxu0
    %v918 = vpop.f32.mrf.mxu0
    %919 = vdwg.mxu0
    %v920 = vmax.f32 %v915, 0.0
    %v921 = vpack.c.bf16 %v920, %v920
    %v922 = vld [vmem:[%s11] sm:$0xf]
    %v923 = vld [vmem:[%s11 + $0x4] sm:$0xf]
    %v924 = vld [vmem:[%s12] sm:$0x1]
    %v926 = vlaneseq
    %v927 = vshrl.u32 %v926, 7
    %v928 = vsub.s32 0, %v927
    %v929 = vrot.slane %v924, %v928
    %v933 = vunpack.c.l.b16 %v922
    %v934 = vunpack.c.l.b16 %v923
    %v935 = vpack.c.b16 %v934, %v933
    %v938 = vsel %vm485, %v921, 0
    %940 = vmatprep.subr.bf16.mxu0 0
    %941 = vmatpush1.bf16.msra.mxu0 0
    %942 = vmatprep.subr.bf16.mxu0 0
    %943 = vmatpush1.bf16.msra.mxu0 0
    %944 = vmatprep.subr.bf16.mxu0 0
    %945 = vmatpush1.bf16.msra.mxu0 0
    %946 = vmatprep.subr.bf16.mxu0 0
    %947 = vmatpush1.bf16.msra.mxu0 0
    %948 = vmatprep.subr.bf16.mxu0 0
    %949 = vmatpush1.bf16.msra.mxu0 0
    %950 = vmatprep.subr.bf16.mxu0 0
    %951 = vmatpush1.bf16.msra.mxu0 0
    %952 = vmatprep.subr.bf16.mxu0 0
    %953 = vmatpush1.bf16.msra.mxu0 0
    %954 = vmatprep.subr.bf16.mxu0 0
    %955 = vmatpush1.bf16.msra.mxu0 %v935
    %956 = vmatprep.subr.bf16.mxu0 0
    %957 = vmatpush2.bf16.msra.mxu0 0
    %958 = vmatprep.subr.bf16.mxu0 0
    %959 = vmatpush2.bf16.msra.mxu0 0
    %960 = vmatprep.subr.bf16.mxu0 0
    %961 = vmatpush2.bf16.msra.mxu0 0
    %962 = vmatprep.subr.bf16.mxu0 0
    %963 = vmatpush2.bf16.msra.mxu0 0
    %964 = vmatprep.subr.bf16.mxu0 0
    %965 = vmatpush2.bf16.msra.mxu0 0
    %966 = vmatprep.subr.bf16.mxu0 0
    %967 = vmatpush2.bf16.msra.mxu0 0
    %968 = vmatprep.subr.bf16.mxu0 0
    %969 = vmatpush2.bf16.msra.mxu0 0
    %970 = vmatprep.subr.bf16.mxu0 0
    %971 = vmatpush2.bf16.msra.mxu0 0
    %972 = vmatprep.mubr.bf16.mxu0 0
    %973 = vmatmul.mubr.bf16.gmra.mxu0 %v938
    %v974 = vpop.f32.mrf.mxu0
    %v975 = vadd.f32 %v929, %v974
    %v976 = vpop.f32.mrf.mxu0
    %v977 = vpop.f32.mrf.mxu0
    %v978 = vpop.f32.mrf.mxu0
    %979 = vdwg.mxu0
    %v980 = vmax.f32 %v975, 0.0
    %v981 = vpack.c.bf16 %v980, %v980
    %v982 = vld [vmem:[%s13] sm:$0xf]
    %v983 = vld [vmem:[%s13 + $0x4] sm:$0xf]
    %v984 = vld [vmem:[%s13 + $0x8] sm:$0xf]
    %v985 = vld [vmem:[%s13 + $0xc] sm:$0xf]
    %v986 = vld [vmem:[%s14] sm:$0x1]
    %v988 = vlaneseq
    %v989 = vshrl.u32 %v988, 7
    %v990 = vsub.s32 0, %v989
    %v991 = vrot.slane %v986, %v990
    %v997 = vunpack.c.l.b16 %v982
    %v998 = vunpack.c.l.b16 %v983
    %v999 = vunpack.c.l.b16 %v984
    %v1000 = vunpack.c.l.b16 %v985
    %v1001 = vpack.c.b16 %v998, %v997
    %v1002 = vpack.c.b16 %v1000, %v999
    %v1006 = vsel %vm759, %v981, 0
    %1008 = vmatprep.subr.bf16.mxu0 0
    %1009 = vmatpush1.bf16.msra.mxu0 0
    %1010 = vmatprep.subr.bf16.mxu0 0
    %1011 = vmatpush1.bf16.msra.mxu0 0
    %1012 = vmatprep.subr.bf16.mxu0 0
    %1013 = vmatpush1.bf16.msra.mxu0 0
    %1014 = vmatprep.subr.bf16.mxu0 0
    %1015 = vmatpush1.bf16.msra.mxu0 0
    %1016 = vmatprep.subr.bf16.mxu0 0
    %1017 = vmatpush1.bf16.msra.mxu0 0
    %1018 = vmatprep.subr.bf16.mxu0 0
    %1019 = vmatpush1.bf16.msra.mxu0 0
    %1020 = vmatprep.subr.bf16.mxu0 0
    %1021 = vmatpush1.bf16.msra.mxu0 %v1002
    %1022 = vmatprep.subr.bf16.mxu0 0
    %1023 = vmatpush1.bf16.msra.mxu0 %v1001
    %1024 = vmatprep.subr.bf16.mxu0 0
    %1025 = vmatpush2.bf16.msra.mxu0 0
    %1026 = vmatprep.subr.bf16.mxu0 0
    %1027 = vmatpush2.bf16.msra.mxu0 0
    %1028 = vmatprep.subr.bf16.mxu0 0
    %1029 = vmatpush2.bf16.msra.mxu0 0
    %1030 = vmatprep.subr.bf16.mxu0 0
    %1031 = vmatpush2.bf16.msra.mxu0 0
    %1032 = vmatprep.subr.bf16.mxu0 0
    %1033 = vmatpush2.bf16.msra.mxu0 0
    %1034 = vmatprep.subr.bf16.mxu0 0
    %1035 = vmatpush2.bf16.msra.mxu0 0
    %1036 = vmatprep.subr.bf16.mxu0 0
    %1037 = vmatpush2.bf16.msra.mxu0 0
    %1038 = vmatprep.subr.bf16.mxu0 0
    %1039 = vmatpush2.bf16.msra.mxu0 0
    %1040 = vmatprep.mubr.bf16.mxu0 0
    %1041 = vmatmul.mubr.bf16.gmra.mxu0 %v1006
    %v1042 = vpop.f32.mrf.mxu0
    %v1043 = vadd.f32 %v991, %v1042
    %v1044 = vpop.f32.mrf.mxu0
    %v1045 = vpop.f32.mrf.mxu0
    %v1046 = vpop.f32.mrf.mxu0
    %1047 = vdwg.mxu0
    %v1048 = vmax.f32 %v1043, 0.0
    %v1049 = vpack.c.bf16 %v1048, %v1048
    %v1050 = vld [vmem:[%s15] sm:$0xff]
    %v1051 = vld [vmem:[%s15 + $0x8] sm:$0xff]
    %v1052 = vld [vmem:[%s15 + $0x10] sm:$0xff]
    %v1053 = vld [vmem:[%s15 + $0x18] sm:$0xf]
    %v1054 = vld [vmem:[%s15 + $0x1c] sm:$0xff]
    %v1055 = vld [vmem:[%s15 + $0x24] sm:$0xff]
    %v1056 = vld [vmem:[%s15 + $0x2c] sm:$0xff]
    %v1057 = vld [vmem:[%s15 + $0x34] sm:$0xf]
    %v1058 = vld [vmem:[%s15 + $0x38] sm:$0xff]
    %v1059 = vld [vmem:[%s15 + $0x40] sm:$0xff]
    %v1060 = vld [vmem:[%s15 + $0x48] sm:$0xff]
    %v1061 = vld [vmem:[%s15 + $0x50] sm:$0xf]
    %v1062 = vld [vmem:[%s15 + $0x54] sm:$0xff]
    %v1063 = vld [vmem:[%s15 + $0x5c] sm:$0xff]
    %v1064 = vld [vmem:[%s15 + $0x64] sm:$0xff]
    %v1065 = vld [vmem:[%s15 + $0x6c] sm:$0xf]
    %v1066 = vld [vmem:[%s15 + $0x70] sm:$0xff]
    %v1067 = vld [vmem:[%s15 + $0x78] sm:$0xff]
    %v1068 = vld [vmem:[%s15 + $0x80] sm:$0xff]
    %v1069 = vld [vmem:[%s15 + $0x88] sm:$0xf]
    %v1070 = vld [vmem:[%s15 + $0x8c] sm:$0xff]
    %v1071 = vld [vmem:[%s15 + $0x94] sm:$0xff]
    %v1072 = vld [vmem:[%s15 + $0x9c] sm:$0xff]
    %v1073 = vld [vmem:[%s15 + $0xa4] sm:$0xf]
    %v1074 = vld [vmem:[%s15 + $0xa8] sm:$0xff]
    %v1075 = vld [vmem:[%s15 + $0xb0] sm:$0xff]
    %v1076 = vld [vmem:[%s15 + $0xb8] sm:$0xff]
    %v1077 = vld [vmem:[%s15 + $0xc0] sm:$0xf]
    %v1078 = vld [vmem:[%s15 + $0xc4] sm:$0xff]
    %v1079 = vld [vmem:[%s15 + $0xcc] sm:$0xff]
    %v1080 = vld [vmem:[%s15 + $0xd4] sm:$0xff]
    %v1081 = vld [vmem:[%s15 + $0xdc] sm:$0xf]
    %v1082 = vld [vmem:[%s16] sm:$0x7f]
    %v1084 = vlaneseq
    %v1085 = vshrl.u32 %v1084, 7
    %v1086 = vsub.s32 0, %v1085
    %v1087 = vrot.slane %v1082, %v1086
    %v1088 = vlaneseq
    %v1089 = vshrl.u32 %v1088, 7
    %v1090 = vsub.s32 1, %v1089
    %v1091 = vrot.slane %v1082, %v1090
    %v1092 = vlaneseq
    %v1093 = vshrl.u32 %v1092, 7
    %v1094 = vsub.s32 2, %v1093
    %v1095 = vrot.slane %v1082, %v1094
    %v1096 = vlaneseq
    %v1097 = vshrl.u32 %v1096, 7
    %v1098 = vsub.s32 3, %v1097
    %v1099 = vrot.slane %v1082, %v1098
    %v1100 = vlaneseq
    %v1101 = vshrl.u32 %v1100, 7
    %v1102 = vsub.s32 4, %v1101
    %v1103 = vrot.slane %v1082, %v1102
    %v1104 = vlaneseq
    %v1105 = vshrl.u32 %v1104, 7
    %v1106 = vsub.s32 5, %v1105
    %v1107 = vrot.slane %v1082, %v1106
    %v1108 = vlaneseq
    %v1109 = vshrl.u32 %v1108, 7
    %v1110 = vsub.s32 6, %v1109
    %v1111 = vrot.slane %v1082, %v1110
    %v1151 = vunpack.c.l.b16 %v1050
    %v1152 = vunpack.c.h.b16 %v1050
    %v1153 = vunpack.c.l.b16 %v1051
    %v1154 = vunpack.c.h.b16 %v1051
    %v1155 = vunpack.c.l.b16 %v1052
    %v1156 = vunpack.c.h.b16 %v1052
    %v1157 = vunpack.c.l.b16 %v1053
    %v1158 = vunpack.c.l.b16 %v1054
    %v1159 = vunpack.c.h.b16 %v1054
    %v1160 = vunpack.c.l.b16 %v1055
    %v1161 = vunpack.c.h.b16 %v1055
    %v1162 = vunpack.c.l.b16 %v1056
    %v1163 = vunpack.c.h.b16 %v1056
    %v1164 = vunpack.c.l.b16 %v1057
    %v1165 = vunpack.c.l.b16 %v1058
    %v1166 = vunpack.c.h.b16 %v1058
    %v1167 = vunpack.c.l.b16 %v1059
    %v1168 = vunpack.c.h.b16 %v1059
    %v1169 = vunpack.c.l.b16 %v1060
    %v1170 = vunpack.c.h.b16 %v1060
    %v1171 = vunpack.c.l.b16 %v1061
    %v1172 = vunpack.c.l.b16 %v1062
    %v1173 = vunpack.c.h.b16 %v1062
    %v1174 = vunpack.c.l.b16 %v1063
    %v1175 = vunpack.c.h.b16 %v1063
    %v1176 = vunpack.c.l.b16 %v1064
    %v1177 = vunpack.c.h.b16 %v1064
    %v1178 = vunpack.c.l.b16 %v1065
    %v1179 = vunpack.c.l.b16 %v1066
    %v1180 = vunpack.c.h.b16 %v1066
    %v1181 = vunpack.c.l.b16 %v1067
    %v1182 = vunpack.c.h.b16 %v1067
    %v1183 = vunpack.c.l.b16 %v1068
    %v1184 = vunpack.c.h.b16 %v1068
    %v1185 = vunpack.c.l.b16 %v1069
    %v1186 = vunpack.c.l.b16 %v1070
    %v1187 = vunpack.c.h.b16 %v1070
    %v1188 = vunpack.c.l.b16 %v1071
    %v1189 = vunpack.c.h.b16 %v1071
    %v1190 = vunpack.c.l.b16 %v1072
    %v1191 = vunpack.c.h.b16 %v1072
    %v1192 = vunpack.c.l.b16 %v1073
    %v1193 = vunpack.c.l.b16 %v1074
    %v1194 = vunpack.c.h.b16 %v1074
    %v1195 = vunpack.c.l.b16 %v1075
    %v1196 = vunpack.c.h.b16 %v1075
    %v1197 = vunpack.c.l.b16 %v1076
    %v1198 = vunpack.c.h.b16 %v1076
    %v1199 = vunpack.c.l.b16 %v1077
    %v1200 = vunpack.c.l.b16 %v1078
    %v1201 = vunpack.c.h.b16 %v1078
    %v1202 = vunpack.c.l.b16 %v1079
    %v1203 = vunpack.c.h.b16 %v1079
    %v1204 = vunpack.c.l.b16 %v1080
    %v1205 = vunpack.c.h.b16 %v1080
    %v1206 = vunpack.c.l.b16 %v1081
    %v1207 = vpack.c.b16 %v1158, %v1151
    %v1208 = vpack.c.b16 %v1159, %v1152
    %v1209 = vpack.c.b16 %v1160, %v1153
    %v1210 = vpack.c.b16 %v1161, %v1154
    %v1211 = vpack.c.b16 %v1162, %v1155
    %v1212 = vpack.c.b16 %v1163, %v1156
    %v1213 = vpack.c.b16 %v1164, %v1157
    %v1214 = vpack.c.b16 %v1172, %v1165
    %v1215 = vpack.c.b16 %v1173, %v1166
    %v1216 = vpack.c.b16 %v1174, %v1167
    %v1217 = vpack.c.b16 %v1175, %v1168
    %v1218 = vpack.c.b16 %v1176, %v1169
    %v1219 = vpack.c.b16 %v1177, %v1170
    %v1220 = vpack.c.b16 %v1178, %v1171
    %v1221 = vpack.c.b16 %v1186, %v1179
    %v1222 = vpack.c.b16 %v1187, %v1180
    %v1223 = vpack.c.b16 %v1188, %v1181
    %v1224 = vpack.c.b16 %v1189, %v1182
    %v1225 = vpack.c.b16 %v1190, %v1183
    %v1226 = vpack.c.b16 %v1191, %v1184
    %v1227 = vpack.c.b16 %v1192, %v1185
    %v1228 = vpack.c.b16 %v1200, %v1193
    %v1229 = vpack.c.b16 %v1201, %v1194
    %v1230 = vpack.c.b16 %v1202, %v1195
    %v1231 = vpack.c.b16 %v1203, %v1196
    %v1232 = vpack.c.b16 %v1204, %v1197
    %v1233 = vpack.c.b16 %v1205, %v1198
    %v1234 = vpack.c.b16 %v1206, %v1199
    %v1264 = vsel %vm690, %v1049, 0
    %1266 = vmatprep.subr.bf16.mxu0 0
    %1267 = vmatpush1.bf16.msra.mxu0 0
    %1268 = vmatprep.subr.bf16.mxu0 0
    %1269 = vmatpush1.bf16.msra.mxu0 0
    %1270 = vmatprep.subr.bf16.mxu0 0
    %1271 = vmatpush1.bf16.msra.mxu0 0
    %1272 = vmatprep.subr.bf16.mxu0 0
    %1273 = vmatpush1.bf16.msra.mxu0 0
    %1274 = vmatprep.subr.bf16.mxu0 %v1229
    %1275 = vmatpush1.bf16.msra.mxu0 %v1228
    %1276 = vmatprep.subr.bf16.mxu0 %v1222
    %1277 = vmatpush1.bf16.msra.mxu0 %v1221
    %1278 = vmatprep.subr.bf16.mxu0 %v1215
    %1279 = vmatpush1.bf16.msra.mxu0 %v1214
    %1280 = vmatprep.subr.bf16.mxu0 %v1208
    %1281 = vmatpush1.bf16.msra.mxu0 %v1207
    %1282 = vmatprep.subr.bf16.mxu0 0
    %1283 = vmatpush2.bf16.msra.mxu0 0
    %1284 = vmatprep.subr.bf16.mxu0 0
    %1285 = vmatpush2.bf16.msra.mxu0 0
    %1286 = vmatprep.subr.bf16.mxu0 0
    %1287 = vmatpush2.bf16.msra.mxu0 0
    %1288 = vmatprep.subr.bf16.mxu0 0
    %1289 = vmatpush2.bf16.msra.mxu0 0
    %1290 = vmatprep.subr.bf16.mxu0 0
    %1291 = vmatpush2.bf16.msra.mxu0 0
    %1292 = vmatprep.subr.bf16.mxu0 0
    %1293 = vmatpush2.bf16.msra.mxu0 0
    %1294 = vmatprep.subr.bf16.mxu0 0
    %1295 = vmatpush2.bf16.msra.mxu0 0
    %1296 = vmatprep.subr.bf16.mxu0 0
    %1297 = vmatpush2.bf16.msra.mxu0 0
    %1298 = vmatprep.mubr.bf16.mxu0 0
    %1299 = vmatmul.mubr.bf16.gmra.mxu0 %v1264
    %v1300 = vpop.f32.mrf.mxu0
    %v1301 = vadd.f32 %v1087, %v1300
    %v1302 = vpop.f32.mrf.mxu0
    %v1303 = vadd.f32 %v1091, %v1302
    %v1304 = vpop.f32.mrf.mxu0
    %v1305 = vpop.f32.mrf.mxu0
    %1306 = vdwg.mxu0
    %1307 = vmatprep.subr.bf16.mxu0 0
    %1308 = vmatpush1.bf16.msra.mxu0 0
    %1309 = vmatprep.subr.bf16.mxu0 0
    %1310 = vmatpush1.bf16.msra.mxu0 0
    %1311 = vmatprep.subr.bf16.mxu0 0
    %1312 = vmatpush1.bf16.msra.mxu0 0
    %1313 = vmatprep.subr.bf16.mxu0 0
    %1314 = vmatpush1.bf16.msra.mxu0 0
    %1315 = vmatprep.subr.bf16.mxu0 %v1231
    %1316 = vmatpush1.bf16.msra.mxu0 %v1230
    %1317 = vmatprep.subr.bf16.mxu0 %v1224
    %1318 = vmatpush1.bf16.msra.mxu0 %v1223
    %1319 = vmatprep.subr.bf16.mxu0 %v1217
    %1320 = vmatpush1.bf16.msra.mxu0 %v1216
    %1321 = vmatprep.subr.bf16.mxu0 %v1210
    %1322 = vmatpush1.bf16.msra.mxu0 %v1209
    %1323 = vmatprep.subr.bf16.mxu0 0
    %1324 = vmatpush2.bf16.msra.mxu0 0
    %1325 = vmatprep.subr.bf16.mxu0 0
    %1326 = vmatpush2.bf16.msra.mxu0 0
    %1327 = vmatprep.subr.bf16.mxu0 0
    %1328 = vmatpush2.bf16.msra.mxu0 0
    %1329 = vmatprep.subr.bf16.mxu0 0
    %1330 = vmatpush2.bf16.msra.mxu0 0
    %1331 = vmatprep.subr.bf16.mxu0 0
    %1332 = vmatpush2.bf16.msra.mxu0 0
    %1333 = vmatprep.subr.bf16.mxu0 0
    %1334 = vmatpush2.bf16.msra.mxu0 0
    %1335 = vmatprep.subr.bf16.mxu0 0
    %1336 = vmatpush2.bf16.msra.mxu0 0
    %1337 = vmatprep.subr.bf16.mxu0 0
    %1338 = vmatpush2.bf16.msra.mxu0 0
    %1339 = vmatprep.mubr.bf16.mxu0 0
    %1340 = vmatmul.mubr.bf16.gmra.mxu0 %v1264
    %v1341 = vpop.f32.mrf.mxu0
    %v1342 = vadd.f32 %v1095, %v1341
    %v1343 = vpop.f32.mrf.mxu0
    %v1344 = vadd.f32 %v1099, %v1343
    %v1345 = vpop.f32.mrf.mxu0
    %v1346 = vpop.f32.mrf.mxu0
    %1347 = vdwg.mxu0
    %1348 = vmatprep.subr.bf16.mxu0 0
    %1349 = vmatpush1.bf16.msra.mxu0 0
    %1350 = vmatprep.subr.bf16.mxu0 0
    %1351 = vmatpush1.bf16.msra.mxu0 0
    %1352 = vmatprep.subr.bf16.mxu0 0
    %1353 = vmatpush1.bf16.msra.mxu0 0
    %1354 = vmatprep.subr.bf16.mxu0 0
    %1355 = vmatpush1.bf16.msra.mxu0 0
    %1356 = vmatprep.subr.bf16.mxu0 %v1233
    %1357 = vmatpush1.bf16.msra.mxu0 %v1232
    %1358 = vmatprep.subr.bf16.mxu0 %v1226
    %1359 = vmatpush1.bf16.msra.mxu0 %v1225
    %1360 = vmatprep.subr.bf16.mxu0 %v1219
    %1361 = vmatpush1.bf16.msra.mxu0 %v1218
    %1362 = vmatprep.subr.bf16.mxu0 %v1212
    %1363 = vmatpush1.bf16.msra.mxu0 %v1211
    %1364 = vmatprep.subr.bf16.mxu0 0
    %1365 = vmatpush2.bf16.msra.mxu0 0
    %1366 = vmatprep.subr.bf16.mxu0 0
    %1367 = vmatpush2.bf16.msra.mxu0 0
    %1368 = vmatprep.subr.bf16.mxu0 0
    %1369 = vmatpush2.bf16.msra.mxu0 0
    %1370 = vmatprep.subr.bf16.mxu0 0
    %1371 = vmatpush2.bf16.msra.mxu0 0
    %1372 = vmatprep.subr.bf16.mxu0 0
    %1373 = vmatpush2.bf16.msra.mxu0 0
    %1374 = vmatprep.subr.bf16.mxu0 0
    %1375 = vmatpush2.bf16.msra.mxu0 0
    %1376 = vmatprep.subr.bf16.mxu0 0
    %1377 = vmatpush2.bf16.msra.mxu0 0
    %1378 = vmatprep.subr.bf16.mxu0 0
    %1379 = vmatpush2.bf16.msra.mxu0 0
    %1380 = vmatprep.mubr.bf16.mxu0 0
    %1381 = vmatmul.mubr.bf16.gmra.mxu0 %v1264
    %v1382 = vpop.f32.mrf.mxu0
    %v1383 = vadd.f32 %v1103, %v1382
    %v1384 = vpop.f32.mrf.mxu0
    %v1385 = vadd.f32 %v1107, %v1384
    %v1386 = vpop.f32.mrf.mxu0
    %v1387 = vpop.f32.mrf.mxu0
    %1388 = vdwg.mxu0
    %1389 = vmatprep.subr.bf16.mxu0 0
    %1390 = vmatpush1.bf16.msra.mxu0 0
    %1391 = vmatprep.subr.bf16.mxu0 0
    %1392 = vmatpush1.bf16.msra.mxu0 0
    %1393 = vmatprep.subr.bf16.mxu0 0
    %1394 = vmatpush1.bf16.msra.mxu0 0
    %1395 = vmatprep.subr.bf16.mxu0 0
    %1396 = vmatpush1.bf16.msra.mxu0 0
    %1397 = vmatprep.subr.bf16.mxu0 0
    %1398 = vmatpush1.bf16.msra.mxu0 %v1234
    %1399 = vmatprep.subr.bf16.mxu0 0
    %1400 = vmatpush1.bf16.msra.mxu0 %v1227
    %1401 = vmatprep.subr.bf16.mxu0 0
    %1402 = vmatpush1.bf16.msra.mxu0 %v1220
    %1403 = vmatprep.subr.bf16.mxu0 0
    %1404 = vmatpush1.bf16.msra.mxu0 %v1213
    %1405 = vmatprep.subr.bf16.mxu0 0
    %1406 = vmatpush2.bf16.msra.mxu0 0
    %1407 = vmatprep.subr.bf16.mxu0 0
    %1408 = vmatpush2.bf16.msra.mxu0 0
    %1409 = vmatprep.subr.bf16.mxu0 0
    %1410 = vmatpush2.bf16.msra.mxu0 0
    %1411 = vmatprep.subr.bf16.mxu0 0
    %1412 = vmatpush2.bf16.msra.mxu0 0
    %1413 = vmatprep.subr.bf16.mxu0 0
    %1414 = vmatpush2.bf16.msra.mxu0 0
    %1415 = vmatprep.subr.bf16.mxu0 0
    %1416 = vmatpush2.bf16.msra.mxu0 0
    %1417 = vmatprep.subr.bf16.mxu0 0
    %1418 = vmatpush2.bf16.msra.mxu0 0
    %1419 = vmatprep.subr.bf16.mxu0 0
    %1420 = vmatpush2.bf16.msra.mxu0 0
    %1421 = vmatprep.mubr.bf16.mxu0 0
    %1422 = vmatmul.mubr.bf16.gmra.mxu0 %v1264
    %v1423 = vpop.f32.mrf.mxu0
    %v1424 = vadd.f32 %v1111, %v1423
    %v1425 = vpop.f32.mrf.mxu0
    %v1426 = vpop.f32.mrf.mxu0
    %v1427 = vpop.f32.mrf.mxu0
    %1428 = vdwg.mxu0
    %v1429 = vxor.u32 %v1301, 2147483648
    %v1430 = vxor.u32 %v1303, 2147483648
    %v1431 = vxor.u32 %v1342, 2147483648
    %v1432 = vxor.u32 %v1344, 2147483648
    %v1433 = vxor.u32 %v1383, 2147483648
    %v1434 = vxor.u32 %v1385, 2147483648
    %v1435 = vxor.u32 %v1424, 2147483648
    %v1436 = vmul.f32 %v1429, 1.442695
    %v1437 = vpow.pop %v1436
    %v1438 = vmul.f32 %v1430, 1.442695
    %v1439 = vpow.pop %v1438
    %v1440 = vmul.f32 %v1431, 1.442695
    %v1441 = vpow.pop %v1440
    %v1442 = vmul.f32 %v1432, 1.442695
    %v1443 = vpow.pop %v1442
    %v1444 = vmul.f32 %v1433, 1.442695
    %v1445 = vpow.pop %v1444
    %v1446 = vmul.f32 %v1434, 1.442695
    %v1447 = vpow.pop %v1446
    %v1448 = vmul.f32 %v1435, 1.442695
    %v1449 = vpow.pop %v1448
    %v1450 = vadd.f32 %v1437, 1.0
    %v1451 = vadd.f32 %v1439, 1.0
    %v1452 = vadd.f32 %v1441, 1.0
    %v1453 = vadd.f32 %v1443, 1.0
    %v1454 = vadd.f32 %v1445, 1.0
    %v1455 = vadd.f32 %v1447, 1.0
    %v1456 = vadd.f32 %v1449, 1.0
    %v1457 = vrcp.pop %v1450
    %v1458 = vmul.f32 1.0, %v1457
    %v1459 = vrcp.pop %v1451
    %v1460 = vmul.f32 1.0, %v1459
    %v1461 = vrcp.pop %v1452
    %v1462 = vmul.f32 1.0, %v1461
    %v1463 = vrcp.pop %v1453
    %v1464 = vmul.f32 1.0, %v1463
    %v1465 = vrcp.pop %v1454
    %v1466 = vmul.f32 1.0, %v1465
    %v1467 = vrcp.pop %v1455
    %v1468 = vmul.f32 1.0, %v1467
    %v1469 = vrcp.pop %v1456
    %v1470 = vmul.f32 1.0, %v1469
    %1471 = vst [vmem:[#allocation2] sm:$0xff] %v1458
    %1472 = vst [vmem:[#allocation2 + $0x8] sm:$0xff] %v1460
    %1473 = vst [vmem:[#allocation2 + $0x10] sm:$0xff] %v1462
    %1474 = vst [vmem:[#allocation2 + $0x18] sm:$0xff] %v1464
    %1475 = vst [vmem:[#allocation2 + $0x20] sm:$0xff] %v1466
    %1476 = vst [vmem:[#allocation2 + $0x28] sm:$0xff] %v1468
    %1477 = vst.msk [vmem:[#allocation2 + $0x30] sm:$0xff] %vm485, %v1470
    // Predicated region
    $region70: #{autoencoder_forward.1} parent=1 // pred_check
      _
    $region71: #{autoencoder_forward.1} parent=1 // pred_check_branch
      %1479 = sbr.rel (0) target = $region73
    $region72: #{autoencoder_forward.1} parent=1 // pred_region
      %s1481 = ssub.s32 896, 896
      %1482 = vsyncadd [#allocation3], %s1481
      %s1484 = sshll.u32 [#allocation2], 4
      %s1485 = int_to_ptr.vmem [resolvable:$true] %s1484
      %1487 = dma.vmem_to_hbm [thread:$0]  %s1485, 896, %s17, [#allocation3]
    $region73: #{autoencoder_forward.1} parent=1 // pred_fallthru
      _
    // Predicated region
    $region74: #{autoencoder_forward.1} parent=1 // pred_check
      _
    $region75: #{autoencoder_forward.1} parent=1 // pred_check_branch
      %1489 = sbr.rel (0) target = $region77
    $region76: #{autoencoder_forward.1} parent=1 // pred_region
      %1490 = dma.done [#allocation3], 896
    $region77: #{autoencoder_forward.1} parent=1 // pred_fallthru
      _
    %1491 = vsyncpa [#allocation3], 1

</llo_original>
